<compile_context>
chip_gen: v7x
topology: tpu7x:2x2x1
jax: 0.10.0
libtpu: 0.0.40
codegen_flags: <defaults>
</compile_context>

<pallas_src>
import math

import jax
import jax.numpy as jnp
from jax.experimental import pallas as pl
from jax.experimental.pallas import tpu as pltpu

# ---- module hyperparameters (small, forward-consistent shapes) -------------
HEADS = 4
DK = 8                    # keys_dimension
DV = 8                    # values_dimension (== DK so concat == d_model)
D = HEADS * DK            # model_dimension = 32
HID = 4 * D               # feed-forward hidden = 128
SEQ = 8                   # n (number of "words" / rows per sequence)
BATCH = 4                 # independent sequences, one per grid step
EPS = 1e-5                # torch layer_norm default eps
_INV_N = 1.0 / float(SEQ * D)


def encoder_layer_kernel(x_ref,
                         wqkv_ref, bqkv_ref,   # (D, 3*H*DK), (1, 3*H*DK) pre-T, Q pre-scaled
                         wo_ref, bo_ref,       # (H, DV, D),  (1, D)      wo.T split per head
                         w1_ref, b1_ref,       # (D, HID),    (1, HID)    pre-T
                         w2_ref, b2_ref,       # (HID, D),    (1, D)      pre-T
                         out_ref):
    x = x_ref[0]                                             # (SEQ, D) f32

    # ----- Fused Q/K/V projection: one matmul for all heads -----------------
    qkv = jnp.dot(x, wqkv_ref[...],
                  preferred_element_type=jnp.float32) + bqkv_ref[...]   # (SEQ, 3*H*DK)

    # ----- Per-head attention, accumulated straight into output projection --
    proj = jnp.zeros((SEQ, D), jnp.float32)
    for h in range(HEADS):                                   # static unroll
        q = qkv[:, h * DK:(h + 1) * DK]                      # already scaled by 1/sqrt(DK)
        k = qkv[:, (HEADS + h) * DK:(HEADS + h + 1) * DK]
        v = qkv[:, (2 * HEADS + h) * DV:(2 * HEADS + h + 1) * DV]
        s = jnp.dot(q, k.T, preferred_element_type=jnp.float32)
        s = s - jnp.max(s, axis=-1, keepdims=True)
        p = jnp.exp(s)
        p = p * pl.reciprocal(jnp.sum(p, axis=-1, keepdims=True), approx=True)
        head = jnp.dot(p, v, preferred_element_type=jnp.float32)        # (SEQ, DV)
        proj = proj + jnp.dot(head, wo_ref[h],
                              preferred_element_type=jnp.float32)       # no concat
    proj = proj + bo_ref[...]

    # ----- Residual + full-tensor layer_norm (single-pass stats) ------------
    z = proj + x
    s1 = jnp.sum(z)
    s2 = jnp.sum(z * z)
    mu = s1 * _INV_N
    var = s2 * _INV_N - mu * mu
    y = (z - mu) * jax.lax.rsqrt(var + EPS)

    # ----- Feed-forward network ----------------------------------------------
    h1 = jnp.dot(y, w1_ref[...], preferred_element_type=jnp.float32) + b1_ref[...]
    h1 = jnp.maximum(h1, 0.0)                                # ReLU
    r = jnp.dot(h1, w2_ref[...], preferred_element_type=jnp.float32) + b2_ref[...]

    # ----- Residual + full-tensor layer_norm (single-pass stats) ------------
    z2 = r + y
    t1 = jnp.sum(z2)
    t2 = jnp.sum(z2 * z2)
    mu2 = t1 * _INV_N
    var2 = t2 * _INV_N - mu2 * mu2
    out_ref[0] = (z2 - mu2) * jax.lax.rsqrt(var2 + EPS)


def _weight_spec(arr):
    nd = arr.ndim
    return pl.BlockSpec(arr.shape, lambda b, _nd=nd: (0,) * _nd)   # weights VMEM-resident


def encoder_layer(x, packed_params):
    """x: (B, SEQ, D) batch of independent sequences."""
    B = x.shape[0]
    in_specs = [pl.BlockSpec((1, SEQ, D), lambda b: (b, 0, 0))]
    in_specs += [_weight_spec(p) for p in packed_params]
    return pl.pallas_call(
        encoder_layer_kernel,
        out_shape=jax.ShapeDtypeStruct((B, SEQ, D), jnp.float32),
        grid=(B,),
        in_specs=in_specs,
        out_specs=pl.BlockSpec((1, SEQ, D), lambda b: (b, 0, 0)),
        compiler_params=pltpu.CompilerParams(
            dimension_semantics=("parallel",)),
    )(x, *packed_params)
    # TODO(synk): with D=32 the output store is still a masked (sub-128-lane)
    # vst; a lane-dense (B, SEQ*D) output slab would need an in-kernel relayout.


# ---- deterministic parameter init (mimics nn.Linear default init) ----------
def init_linear(key, out_dim, in_dim):
    kw, kb = jax.random.split(key)
    bound = 1.0 / math.sqrt(in_dim)
    w = jax.random.uniform(kw, (out_dim, in_dim), jnp.float32, -bound, bound)
    b = jax.random.uniform(kb, (out_dim,), jnp.float32, -bound, bound)
    return w, b


def make_params(key):
    """Raw PyTorch-layout parameters: W is (out_features, in_features)."""
    keys = jax.random.split(key, 3 * HEADS + 3)
    idx = 0

    def stack_heads(out_dim):
        nonlocal idx
        ws, bs = [], []
        for _ in range(HEADS):
            w, b = init_linear(keys[idx], out_dim, D)
            idx += 1
            ws.append(w)
            bs.append(b)
        return jnp.stack(ws), jnp.stack(bs)          # (H, out, D), (H, out)

    wq, bq = stack_heads(DK)
    wk, bk = stack_heads(DK)
    wv, bv = stack_heads(DV)
    wo, bo = init_linear(keys[idx], D, D); idx += 1
    w1, b1 = init_linear(keys[idx], HID, D); idx += 1
    w2, b2 = init_linear(keys[idx], D, HID); idx += 1
    return dict(wq=wq, bq=bq, wk=wk, bk=bk, wv=wv, bv=bv,
                wo=wo, bo=bo, w1=w1, b1=b1, w2=w2, b2=b2)


def pack_params(p):
    """Wrapper-side layout plumbing: transpose to (in, out), fuse QKV, fold scale,
    split the output projection per head."""
    inv = 1.0 / math.sqrt(DK)

    def fuse_w(w):                                   # (H, out, D) -> (D, H*out)
        return jnp.transpose(w, (2, 0, 1)).reshape(D, -1)

    wqkv_t = jnp.concatenate(
        [fuse_w(p["wq"]) * inv, fuse_w(p["wk"]), fuse_w(p["wv"])], axis=1)      # (D, 96)
    bqkv = jnp.concatenate(
        [p["bq"].reshape(1, -1) * inv,
         p["bk"].reshape(1, -1),
         p["bv"].reshape(1, -1)], axis=1)                                        # (1, 96)

    wo_t = p["wo"].T.reshape(HEADS, DV, D)           # per-head slices of wo.T
    bo = p["bo"].reshape(1, D)
    w1_t = p["w1"].T                                 # (D, HID)
    b1 = p["b1"].reshape(1, HID)
    w2_t = p["w2"].T                                 # (HID, D)
    b2 = p["b2"].reshape(1, D)
    return [wqkv_t, bqkv, wo_t, bo, w1_t, b1, w2_t, b2]


# ---- plain-JAX reference (PyTorch-faithful, per sequence) -------------------
def reference_single(x, p):
    heads = []
    for h in range(HEADS):
        q = x @ p["wq"][h].T + p["bq"][h]
        k = x @ p["wk"][h].T + p["bk"][h]
        v = x @ p["wv"][h].T + p["bv"][h]
        s = q @ k.T / math.sqrt(DK)
        a = jax.nn.softmax(s, axis=-1)
        heads.append(a @ v)
    proj = jnp.concatenate(heads, axis=1) @ p["wo"].T + p["bo"]
    z = proj + x
    mu = jnp.mean(z)
    var = jnp.mean((z - mu) ** 2)
    y = (z - mu) * jax.lax.rsqrt(var + EPS)
    r = jnp.maximum(y @ p["w1"].T + p["b1"], 0.0) @ p["w2"].T + p["b2"]
    z2 = r + y
    mu2 = jnp.mean(z2)
    var2 = jnp.mean((z2 - mu2) ** 2)
    return (z2 - mu2) * jax.lax.rsqrt(var2 + EPS)


if __name__ == "__main__":
    root = jax.random.PRNGKey(0)
    kx, kp = jax.random.split(root)
    x = jax.random.normal(kx, (BATCH, SEQ, D), jnp.float32)
    raw = make_params(kp)
    packed = pack_params(raw)

    out = encoder_layer(x, packed)
    jax.block_until_ready(out)

    ref = jax.vmap(lambda xs: reference_single(xs, raw))(x)
    assert out.shape == (BATCH, SEQ, D)
    # 2e-3 tolerance accommodates the EUP approximate reciprocal in the softmax
    # (all other math is exact f32 with f32 accumulation on every dot).
    assert jnp.allclose(out, ref, atol=2e-3, rtol=2e-3), \
        float(jnp.max(jnp.abs(out - ref)))

    print("KERNEL_OK")
</pallas_src>

<mosaic_0001>
module attributes {stable_mosaic.version = 11 : i64} {
  func.func @encoder_layer_kernel(%arg0: i32, %arg1: memref<1x8x32xf32, #tpu.memory_space<vmem>>, %arg2: memref<32x96xf32, #tpu.memory_space<vmem>>, %arg3: memref<1x96xf32, #tpu.memory_space<vmem>>, %arg4: memref<4x8x32xf32, #tpu.memory_space<vmem>>, %arg5: memref<1x32xf32, #tpu.memory_space<vmem>>, %arg6: memref<32x128xf32, #tpu.memory_space<vmem>>, %arg7: memref<1x128xf32, #tpu.memory_space<vmem>>, %arg8: memref<128x32xf32, #tpu.memory_space<vmem>>, %arg9: memref<1x32xf32, #tpu.memory_space<vmem>>, %arg10: memref<1x8x32xf32, #tpu.memory_space<vmem>>) attributes {dimension_semantics = [#tpu.dimension_semantics<parallel>], iteration_bounds = array<i64: 4>, scalar_prefetch = 0 : i64, scratch_operands = 0 : i64, tpu.core_type = #tpu.core_type<tc>, window_params = [{transform_indices = @transform_0, window_bounds = array<i64: 1, 8, 32>}, {pipeline_mode = #tpu.pipeline_mode<synchronous>, transform_indices = @transform_1, window_bounds = array<i64: 32, 96>}, {pipeline_mode = #tpu.pipeline_mode<synchronous>, transform_indices = @transform_2, window_bounds = array<i64: 1, 96>}, {pipeline_mode = #tpu.pipeline_mode<synchronous>, transform_indices = @transform_3, window_bounds = array<i64: 4, 8, 32>}, {pipeline_mode = #tpu.pipeline_mode<synchronous>, transform_indices = @transform_4, window_bounds = array<i64: 1, 32>}, {pipeline_mode = #tpu.pipeline_mode<synchronous>, transform_indices = @transform_5, window_bounds = array<i64: 32, 128>}, {pipeline_mode = #tpu.pipeline_mode<synchronous>, transform_indices = @transform_6, window_bounds = array<i64: 1, 128>}, {pipeline_mode = #tpu.pipeline_mode<synchronous>, transform_indices = @transform_7, window_bounds = array<i64: 128, 32>}, {pipeline_mode = #tpu.pipeline_mode<synchronous>, transform_indices = @transform_8, window_bounds = array<i64: 1, 32>}, {transform_indices = @transform_9, window_bounds = array<i64: 1, 8, 32>}]} {
    %c0 = arith.constant 0 : index
    %c0_0 = arith.constant 0 : index
    %c0_1 = arith.constant 0 : index
    %0 = vector.load %arg1[%c0, %c0_0, %c0_1] : memref<1x8x32xf32, #tpu.memory_space<vmem>>, vector<1x8x32xf32>
    %1 = vector.shape_cast %0 : vector<1x8x32xf32> to vector<8x32xf32>
    %c0_2 = arith.constant 0 : index
    %c0_3 = arith.constant 0 : index
    %2 = vector.load %arg2[%c0_2, %c0_3] : memref<32x96xf32, #tpu.memory_space<vmem>>, vector<32x96xf32>
    %cst = arith.constant dense<0.000000e+00> : vector<8x96xf32>
    %3 = tpu.matmul %1, %2, %cst {dimension_numbers = #tpu.dot_dimension_numbers<[1], [0], [0], [1], [0, 0, 1, 1], [], []>} : vector<8x32xf32>, vector<32x96xf32>, vector<8x96xf32> -> vector<8x96xf32>
    %c0_4 = arith.constant 0 : index
    %c0_5 = arith.constant 0 : index
    %4 = vector.load %arg3[%c0_4, %c0_5] : memref<1x96xf32, #tpu.memory_space<vmem>>, vector<1x96xf32>
    %5 = vector.broadcast %4 : vector<1x96xf32> to vector<8x96xf32>
    %6 = arith.addf %3, %5 : vector<8x96xf32>
    %cst_6 = arith.constant 0.000000e+00 : f32
    %7 = vector.broadcast %cst_6 : f32 to vector<8x32xf32>
    %8 = vector.extract_strided_slice %6 {offsets = [0, 0], sizes = [8, 8], strides = [1, 1]} : vector<8x96xf32> to vector<8x8xf32>
    %9 = vector.extract_strided_slice %6 {offsets = [0, 32], sizes = [8, 8], strides = [1, 1]} : vector<8x96xf32> to vector<8x8xf32>
    %10 = vector.extract_strided_slice %6 {offsets = [0, 64], sizes = [8, 8], strides = [1, 1]} : vector<8x96xf32> to vector<8x8xf32>
    %11 = tpu.transpose %9, [1, 0] : vector<8x8xf32> -> vector<8x8xf32>
    %cst_7 = arith.constant dense<0.000000e+00> : vector<8x8xf32>
    %12 = tpu.matmul %8, %11, %cst_7 {dimension_numbers = #tpu.dot_dimension_numbers<[1], [0], [0], [1], [0, 0, 1, 1], [], []>} : vector<8x8xf32>, vector<8x8xf32>, vector<8x8xf32> -> vector<8x8xf32>
    %cst_8 = arith.constant dense<0xFF800000> : vector<8xf32>
    %13 = vector.multi_reduction <maximumf>, %12, %cst_8 [1] : vector<8x8xf32> to vector<8xf32>
    %14 = vector.shape_cast %13 : vector<8xf32> to vector<8x1xf32>
    %15 = vector.broadcast %14 : vector<8x1xf32> to vector<8x8xf32>
    %16 = arith.subf %12, %15 : vector<8x8xf32>
    %17 = math.exp %16 : vector<8x8xf32>
    %cst_9 = arith.constant dense<0.000000e+00> : vector<8xf32>
    %18 = vector.multi_reduction <add>, %17, %cst_9 [1] : vector<8x8xf32> to vector<8xf32>
    %19 = vector.shape_cast %18 : vector<8xf32> to vector<8x1xf32>
    %20 = tpu.reciprocal %19 {approx = true} : vector<8x1xf32> -> vector<8x1xf32>
    %21 = vector.broadcast %20 : vector<8x1xf32> to vector<8x8xf32>
    %22 = arith.mulf %17, %21 : vector<8x8xf32>
    %cst_10 = arith.constant dense<0.000000e+00> : vector<8x8xf32>
    %23 = tpu.matmul %22, %10, %cst_10 {dimension_numbers = #tpu.dot_dimension_numbers<[1], [0], [0], [1], [0, 0, 1, 1], [], []>} : vector<8x8xf32>, vector<8x8xf32>, vector<8x8xf32> -> vector<8x8xf32>
    %c0_11 = arith.constant 0 : index
    %c0_12 = arith.constant 0 : index
    %c0_13 = arith.constant 0 : index
    %24 = vector.load %arg4[%c0_11, %c0_12, %c0_13] : memref<4x8x32xf32, #tpu.memory_space<vmem>>, vector<1x8x32xf32>
    %25 = vector.shape_cast %24 : vector<1x8x32xf32> to vector<8x32xf32>
    %cst_14 = arith.constant dense<0.000000e+00> : vector<8x32xf32>
    %26 = tpu.matmul %23, %25, %cst_14 {dimension_numbers = #tpu.dot_dimension_numbers<[1], [0], [0], [1], [0, 0, 1, 1], [], []>} : vector<8x8xf32>, vector<8x32xf32>, vector<8x32xf32> -> vector<8x32xf32>
    %27 = arith.addf %7, %26 : vector<8x32xf32>
    %28 = vector.extract_strided_slice %6 {offsets = [0, 8], sizes = [8, 8], strides = [1, 1]} : vector<8x96xf32> to vector<8x8xf32>
    %29 = vector.extract_strided_slice %6 {offsets = [0, 40], sizes = [8, 8], strides = [1, 1]} : vector<8x96xf32> to vector<8x8xf32>
    %30 = vector.extract_strided_slice %6 {offsets = [0, 72], sizes = [8, 8], strides = [1, 1]} : vector<8x96xf32> to vector<8x8xf32>
    %31 = tpu.transpose %29, [1, 0] : vector<8x8xf32> -> vector<8x8xf32>
    %cst_15 = arith.constant dense<0.000000e+00> : vector<8x8xf32>
    %32 = tpu.matmul %28, %31, %cst_15 {dimension_numbers = #tpu.dot_dimension_numbers<[1], [0], [0], [1], [0, 0, 1, 1], [], []>} : vector<8x8xf32>, vector<8x8xf32>, vector<8x8xf32> -> vector<8x8xf32>
    %cst_16 = arith.constant dense<0xFF800000> : vector<8xf32>
    %33 = vector.multi_reduction <maximumf>, %32, %cst_16 [1] : vector<8x8xf32> to vector<8xf32>
    %34 = vector.shape_cast %33 : vector<8xf32> to vector<8x1xf32>
    %35 = vector.broadcast %34 : vector<8x1xf32> to vector<8x8xf32>
    %36 = arith.subf %32, %35 : vector<8x8xf32>
    %37 = math.exp %36 : vector<8x8xf32>
    %cst_17 = arith.constant dense<0.000000e+00> : vector<8xf32>
    %38 = vector.multi_reduction <add>, %37, %cst_17 [1] : vector<8x8xf32> to vector<8xf32>
    %39 = vector.shape_cast %38 : vector<8xf32> to vector<8x1xf32>
    %40 = tpu.reciprocal %39 {approx = true} : vector<8x1xf32> -> vector<8x1xf32>
    %41 = vector.broadcast %40 : vector<8x1xf32> to vector<8x8xf32>
    %42 = arith.mulf %37, %41 : vector<8x8xf32>
    %cst_18 = arith.constant dense<0.000000e+00> : vector<8x8xf32>
    %43 = tpu.matmul %42, %30, %cst_18 {dimension_numbers = #tpu.dot_dimension_numbers<[1], [0], [0], [1], [0, 0, 1, 1], [], []>} : vector<8x8xf32>, vector<8x8xf32>, vector<8x8xf32> -> vector<8x8xf32>
    %c1 = arith.constant 1 : index
    %c0_19 = arith.constant 0 : index
    %c0_20 = arith.constant 0 : index
    %44 = vector.load %arg4[%c1, %c0_19, %c0_20] : memref<4x8x32xf32, #tpu.memory_space<vmem>>, vector<1x8x32xf32>
    %45 = vector.shape_cast %44 : vector<1x8x32xf32> to vector<8x32xf32>
    %cst_21 = arith.constant dense<0.000000e+00> : vector<8x32xf32>
    %46 = tpu.matmul %43, %45, %cst_21 {dimension_numbers = #tpu.dot_dimension_numbers<[1], [0], [0], [1], [0, 0, 1, 1], [], []>} : vector<8x8xf32>, vector<8x32xf32>, vector<8x32xf32> -> vector<8x32xf32>
    %47 = arith.addf %27, %46 : vector<8x32xf32>
    %48 = vector.extract_strided_slice %6 {offsets = [0, 16], sizes = [8, 8], strides = [1, 1]} : vector<8x96xf32> to vector<8x8xf32>
    %49 = vector.extract_strided_slice %6 {offsets = [0, 48], sizes = [8, 8], strides = [1, 1]} : vector<8x96xf32> to vector<8x8xf32>
    %50 = vector.extract_strided_slice %6 {offsets = [0, 80], sizes = [8, 8], strides = [1, 1]} : vector<8x96xf32> to vector<8x8xf32>
    %51 = tpu.transpose %49, [1, 0] : vector<8x8xf32> -> vector<8x8xf32>
    %cst_22 = arith.constant dense<0.000000e+00> : vector<8x8xf32>
    %52 = tpu.matmul %48, %51, %cst_22 {dimension_numbers = #tpu.dot_dimension_numbers<[1], [0], [0], [1], [0, 0, 1, 1], [], []>} : vector<8x8xf32>, vector<8x8xf32>, vector<8x8xf32> -> vector<8x8xf32>
    %cst_23 = arith.constant dense<0xFF800000> : vector<8xf32>
    %53 = vector.multi_reduction <maximumf>, %52, %cst_23 [1] : vector<8x8xf32> to vector<8xf32>
    %54 = vector.shape_cast %53 : vector<8xf32> to vector<8x1xf32>
    %55 = vector.broadcast %54 : vector<8x1xf32> to vector<8x8xf32>
    %56 = arith.subf %52, %55 : vector<8x8xf32>
    %57 = math.exp %56 : vector<8x8xf32>
    %cst_24 = arith.constant dense<0.000000e+00> : vector<8xf32>
    %58 = vector.multi_reduction <add>, %57, %cst_24 [1] : vector<8x8xf32> to vector<8xf32>
    %59 = vector.shape_cast %58 : vector<8xf32> to vector<8x1xf32>
    %60 = tpu.reciprocal %59 {approx = true} : vector<8x1xf32> -> vector<8x1xf32>
    %61 = vector.broadcast %60 : vector<8x1xf32> to vector<8x8xf32>
    %62 = arith.mulf %57, %61 : vector<8x8xf32>
    %cst_25 = arith.constant dense<0.000000e+00> : vector<8x8xf32>
    %63 = tpu.matmul %62, %50, %cst_25 {dimension_numbers = #tpu.dot_dimension_numbers<[1], [0], [0], [1], [0, 0, 1, 1], [], []>} : vector<8x8xf32>, vector<8x8xf32>, vector<8x8xf32> -> vector<8x8xf32>
    %c2 = arith.constant 2 : index
    %c0_26 = arith.constant 0 : index
    %c0_27 = arith.constant 0 : index
    %64 = vector.load %arg4[%c2, %c0_26, %c0_27] : memref<4x8x32xf32, #tpu.memory_space<vmem>>, vector<1x8x32xf32>
    %65 = vector.shape_cast %64 : vector<1x8x32xf32> to vector<8x32xf32>
    %cst_28 = arith.constant dense<0.000000e+00> : vector<8x32xf32>
    %66 = tpu.matmul %63, %65, %cst_28 {dimension_numbers = #tpu.dot_dimension_numbers<[1], [0], [0], [1], [0, 0, 1, 1], [], []>} : vector<8x8xf32>, vector<8x32xf32>, vector<8x32xf32> -> vector<8x32xf32>
    %67 = arith.addf %47, %66 : vector<8x32xf32>
    %68 = vector.extract_strided_slice %6 {offsets = [0, 24], sizes = [8, 8], strides = [1, 1]} : vector<8x96xf32> to vector<8x8xf32>
    %69 = vector.extract_strided_slice %6 {offsets = [0, 56], sizes = [8, 8], strides = [1, 1]} : vector<8x96xf32> to vector<8x8xf32>
    %70 = vector.extract_strided_slice %6 {offsets = [0, 88], sizes = [8, 8], strides = [1, 1]} : vector<8x96xf32> to vector<8x8xf32>
    %71 = tpu.transpose %69, [1, 0] : vector<8x8xf32> -> vector<8x8xf32>
    %cst_29 = arith.constant dense<0.000000e+00> : vector<8x8xf32>
    %72 = tpu.matmul %68, %71, %cst_29 {dimension_numbers = #tpu.dot_dimension_numbers<[1], [0], [0], [1], [0, 0, 1, 1], [], []>} : vector<8x8xf32>, vector<8x8xf32>, vector<8x8xf32> -> vector<8x8xf32>
    %cst_30 = arith.constant dense<0xFF800000> : vector<8xf32>
    %73 = vector.multi_reduction <maximumf>, %72, %cst_30 [1] : vector<8x8xf32> to vector<8xf32>
    %74 = vector.shape_cast %73 : vector<8xf32> to vector<8x1xf32>
    %75 = vector.broadcast %74 : vector<8x1xf32> to vector<8x8xf32>
    %76 = arith.subf %72, %75 : vector<8x8xf32>
    %77 = math.exp %76 : vector<8x8xf32>
    %cst_31 = arith.constant dense<0.000000e+00> : vector<8xf32>
    %78 = vector.multi_reduction <add>, %77, %cst_31 [1] : vector<8x8xf32> to vector<8xf32>
    %79 = vector.shape_cast %78 : vector<8xf32> to vector<8x1xf32>
    %80 = tpu.reciprocal %79 {approx = true} : vector<8x1xf32> -> vector<8x1xf32>
    %81 = vector.broadcast %80 : vector<8x1xf32> to vector<8x8xf32>
    %82 = arith.mulf %77, %81 : vector<8x8xf32>
    %cst_32 = arith.constant dense<0.000000e+00> : vector<8x8xf32>
    %83 = tpu.matmul %82, %70, %cst_32 {dimension_numbers = #tpu.dot_dimension_numbers<[1], [0], [0], [1], [0, 0, 1, 1], [], []>} : vector<8x8xf32>, vector<8x8xf32>, vector<8x8xf32> -> vector<8x8xf32>
    %c3 = arith.constant 3 : index
    %c0_33 = arith.constant 0 : index
    %c0_34 = arith.constant 0 : index
    %84 = vector.load %arg4[%c3, %c0_33, %c0_34] : memref<4x8x32xf32, #tpu.memory_space<vmem>>, vector<1x8x32xf32>
    %85 = vector.shape_cast %84 : vector<1x8x32xf32> to vector<8x32xf32>
    %cst_35 = arith.constant dense<0.000000e+00> : vector<8x32xf32>
    %86 = tpu.matmul %83, %85, %cst_35 {dimension_numbers = #tpu.dot_dimension_numbers<[1], [0], [0], [1], [0, 0, 1, 1], [], []>} : vector<8x8xf32>, vector<8x32xf32>, vector<8x32xf32> -> vector<8x32xf32>
    %87 = arith.addf %67, %86 : vector<8x32xf32>
    %c0_36 = arith.constant 0 : index
    %c0_37 = arith.constant 0 : index
    %88 = vector.load %arg5[%c0_36, %c0_37] : memref<1x32xf32, #tpu.memory_space<vmem>>, vector<1x32xf32>
    %89 = vector.broadcast %88 : vector<1x32xf32> to vector<8x32xf32>
    %90 = arith.addf %87, %89 : vector<8x32xf32>
    %91 = arith.addf %90, %1 : vector<8x32xf32>
    %92 = vector.shape_cast %91 : vector<8x32xf32> to vector<1x8x32xf32>
    %cst_38 = arith.constant dense<0.000000e+00> : vector<1xf32>
    %93 = vector.multi_reduction <add>, %92, %cst_38 [1, 2] : vector<1x8x32xf32> to vector<1xf32>
    %94 = vector.shape_cast %93 : vector<1xf32> to vector<1x1x1xf32>
    %95 = vector.extract %94[0, 0, 0] : f32 from vector<1x1x1xf32>
    %96 = arith.mulf %91, %91 : vector<8x32xf32>
    %97 = vector.shape_cast %96 : vector<8x32xf32> to vector<1x8x32xf32>
    %cst_39 = arith.constant dense<0.000000e+00> : vector<1xf32>
    %98 = vector.multi_reduction <add>, %97, %cst_39 [1, 2] : vector<1x8x32xf32> to vector<1xf32>
    %99 = vector.shape_cast %98 : vector<1xf32> to vector<1x1x1xf32>
    %100 = vector.extract %99[0, 0, 0] : f32 from vector<1x1x1xf32>
    %cst_40 = arith.constant 3.906250e-03 : f32
    %101 = arith.mulf %95, %cst_40 : f32
    %cst_41 = arith.constant 3.906250e-03 : f32
    %102 = arith.mulf %100, %cst_41 : f32
    %103 = arith.mulf %101, %101 : f32
    %104 = arith.subf %102, %103 : f32
    %105 = vector.broadcast %101 : f32 to vector<8x32xf32>
    %106 = arith.subf %91, %105 : vector<8x32xf32>
    %cst_42 = arith.constant 9.99999974E-6 : f32
    %107 = arith.addf %104, %cst_42 : f32
    %108 = math.rsqrt %107 : f32
    %109 = vector.broadcast %108 : f32 to vector<8x32xf32>
    %110 = arith.mulf %106, %109 : vector<8x32xf32>
    %c0_43 = arith.constant 0 : index
    %c0_44 = arith.constant 0 : index
    %111 = vector.load %arg6[%c0_43, %c0_44] : memref<32x128xf32, #tpu.memory_space<vmem>>, vector<32x128xf32>
    %cst_45 = arith.constant dense<0.000000e+00> : vector<8x128xf32>
    %112 = tpu.matmul %110, %111, %cst_45 {dimension_numbers = #tpu.dot_dimension_numbers<[1], [0], [0], [1], [0, 0, 1, 1], [], []>} : vector<8x32xf32>, vector<32x128xf32>, vector<8x128xf32> -> vector<8x128xf32>
    %c0_46 = arith.constant 0 : index
    %c0_47 = arith.constant 0 : index
    %113 = vector.load %arg7[%c0_46, %c0_47] : memref<1x128xf32, #tpu.memory_space<vmem>>, vector<1x128xf32>
    %114 = vector.broadcast %113 : vector<1x128xf32> to vector<8x128xf32>
    %115 = arith.addf %112, %114 : vector<8x128xf32>
    %cst_48 = arith.constant 0.000000e+00 : f32
    %116 = vector.broadcast %cst_48 : f32 to vector<8x128xf32>
    %117 = arith.maximumf %115, %116 : vector<8x128xf32>
    %c0_49 = arith.constant 0 : index
    %c0_50 = arith.constant 0 : index
    %118 = vector.load %arg8[%c0_49, %c0_50] : memref<128x32xf32, #tpu.memory_space<vmem>>, vector<128x32xf32>
    %cst_51 = arith.constant dense<0.000000e+00> : vector<8x32xf32>
    %119 = tpu.matmul %117, %118, %cst_51 {dimension_numbers = #tpu.dot_dimension_numbers<[1], [0], [0], [1], [0, 0, 1, 1], [], []>} : vector<8x128xf32>, vector<128x32xf32>, vector<8x32xf32> -> vector<8x32xf32>
    %c0_52 = arith.constant 0 : index
    %c0_53 = arith.constant 0 : index
    %120 = vector.load %arg9[%c0_52, %c0_53] : memref<1x32xf32, #tpu.memory_space<vmem>>, vector<1x32xf32>
    %121 = vector.broadcast %120 : vector<1x32xf32> to vector<8x32xf32>
    %122 = arith.addf %119, %121 : vector<8x32xf32>
    %123 = arith.addf %122, %110 : vector<8x32xf32>
    %124 = vector.shape_cast %123 : vector<8x32xf32> to vector<1x8x32xf32>
    %cst_54 = arith.constant dense<0.000000e+00> : vector<1xf32>
    %125 = vector.multi_reduction <add>, %124, %cst_54 [1, 2] : vector<1x8x32xf32> to vector<1xf32>
    %126 = vector.shape_cast %125 : vector<1xf32> to vector<1x1x1xf32>
    %127 = vector.extract %126[0, 0, 0] : f32 from vector<1x1x1xf32>
    %128 = arith.mulf %123, %123 : vector<8x32xf32>
    %129 = vector.shape_cast %128 : vector<8x32xf32> to vector<1x8x32xf32>
    %cst_55 = arith.constant dense<0.000000e+00> : vector<1xf32>
    %130 = vector.multi_reduction <add>, %129, %cst_55 [1, 2] : vector<1x8x32xf32> to vector<1xf32>
    %131 = vector.shape_cast %130 : vector<1xf32> to vector<1x1x1xf32>
    %132 = vector.extract %131[0, 0, 0] : f32 from vector<1x1x1xf32>
    %cst_56 = arith.constant 3.906250e-03 : f32
    %133 = arith.mulf %127, %cst_56 : f32
    %cst_57 = arith.constant 3.906250e-03 : f32
    %134 = arith.mulf %132, %cst_57 : f32
    %135 = arith.mulf %133, %133 : f32
    %136 = arith.subf %134, %135 : f32
    %137 = vector.broadcast %133 : f32 to vector<8x32xf32>
    %138 = arith.subf %123, %137 : vector<8x32xf32>
    %cst_58 = arith.constant 9.99999974E-6 : f32
    %139 = arith.addf %136, %cst_58 : f32
    %140 = math.rsqrt %139 : f32
    %141 = vector.broadcast %140 : f32 to vector<8x32xf32>
    %142 = arith.mulf %138, %141 : vector<8x32xf32>
    %c0_59 = arith.constant 0 : index
    %c0_60 = arith.constant 0 : index
    %c0_61 = arith.constant 0 : index
    %143 = vector.load %arg10[%c0_59, %c0_60, %c0_61] : memref<1x8x32xf32, #tpu.memory_space<vmem>>, vector<1x8x32xf32>
    %144 = vector.shape_cast %143 : vector<1x8x32xf32> to vector<8x32xf32>
    %145 = vector.shape_cast %142 : vector<8x32xf32> to vector<1x8x32xf32>
    tpu.vector_store %arg10[%c0_59, %c0_60, %c0_61], %145 {strides = array<i32>} : memref<1x8x32xf32, #tpu.memory_space<vmem>>, vector<1x8x32xf32>,
    return
  }
  func.func @transform_0(%arg0: i32) -> (i32, i32, i32) {
    %c0_i32 = arith.constant 0 : i32
    %c0_i32_0 = arith.constant 0 : i32
    %c0_i32_1 = arith.constant 0 : i32
    return %arg0, %c0_i32, %c0_i32_0 : i32, i32, i32
  }
  func.func @transform_1(%arg0: i32) -> (i32, i32) {
    %c0_i32 = arith.constant 0 : i32
    %c0_i32_0 = arith.constant 0 : i32
    %c0_i32_1 = arith.constant 0 : i32
    return %c0_i32, %c0_i32_0 : i32, i32
  }
  func.func @transform_2(%arg0: i32) -> (i32, i32) {
    %c0_i32 = arith.constant 0 : i32
    %c0_i32_0 = arith.constant 0 : i32
    %c0_i32_1 = arith.constant 0 : i32
    return %c0_i32, %c0_i32_0 : i32, i32
  }
  func.func @transform_3(%arg0: i32) -> (i32, i32, i32) {
    %c0_i32 = arith.constant 0 : i32
    %c0_i32_0 = arith.constant 0 : i32
    %c0_i32_1 = arith.constant 0 : i32
    %c0_i32_2 = arith.constant 0 : i32
    return %c0_i32, %c0_i32_0, %c0_i32_1 : i32, i32, i32
  }
  func.func @transform_4(%arg0: i32) -> (i32, i32) {
    %c0_i32 = arith.constant 0 : i32
    %c0_i32_0 = arith.constant 0 : i32
    %c0_i32_1 = arith.constant 0 : i32
    return %c0_i32, %c0_i32_0 : i32, i32
  }
  func.func @transform_5(%arg0: i32) -> (i32, i32) {
    %c0_i32 = arith.constant 0 : i32
    %c0_i32_0 = arith.constant 0 : i32
    %c0_i32_1 = arith.constant 0 : i32
    return %c0_i32, %c0_i32_0 : i32, i32
  }
  func.func @transform_6(%arg0: i32) -> (i32, i32) {
    %c0_i32 = arith.constant 0 : i32
    %c0_i32_0 = arith.constant 0 : i32
    %c0_i32_1 = arith.constant 0 : i32
    return %c0_i32, %c0_i32_0 : i32, i32
  }
  func.func @transform_7(%arg0: i32) -> (i32, i32) {
    %c0_i32 = arith.constant 0 : i32
    %c0_i32_0 = arith.constant 0 : i32
    %c0_i32_1 = arith.constant 0 : i32
    return %c0_i32, %c0_i32_0 : i32, i32
  }
  func.func @transform_8(%arg0: i32) -> (i32, i32) {
    %c0_i32 = arith.constant 0 : i32
    %c0_i32_0 = arith.constant 0 : i32
    %c0_i32_1 = arith.constant 0 : i32
    return %c0_i32, %c0_i32_0 : i32, i32
  }
  func.func @transform_9(%arg0: i32) -> (i32, i32, i32) {
    %c0_i32 = arith.constant 0 : i32
    %c0_i32_0 = arith.constant 0 : i32
    %c0_i32_1 = arith.constant 0 : i32
    return %arg0, %c0_i32, %c0_i32_0 : i32, i32, i32
  }
}

</mosaic_0001>

<llo_original>
// kernel: tpu_custom_call.1
$region0: #{tpu_custom_call.1}
  #allocation0 [shape = 'u32[]', space=smem, size = 0x4, offset = 0x4, fixed_abs, tag = 'smem constant byte address 0x4 - core index']
  #allocation1 [shape = 'u32[144,128]{1,0:T(1,128)}', space=vmem, size = 0x12000, scoped, tag = 'internal scratch']
  %s0 = inlined_call_operand.vmem [shape: f32[4,8,32], index: 0, kind: input, shape index: {}]
  %s1 = inlined_call_operand.vmem [shape: f32[32,96], index: 1, kind: input, shape index: {}]
  %s2 = inlined_call_operand.vmem [shape: f32[1,96], index: 2, kind: input, shape index: {}]
  %s3 = inlined_call_operand.vmem [shape: f32[4,8,32], index: 3, kind: input, shape index: {}]
  %s4 = inlined_call_operand.vmem [shape: f32[1,32], index: 4, kind: input, shape index: {}]
  %s5 = inlined_call_operand.vmem [shape: f32[32,128], index: 5, kind: input, shape index: {}]
  %s6 = inlined_call_operand.vmem [shape: f32[1,128], index: 6, kind: input, shape index: {}]
  %s7 = inlined_call_operand.vmem [shape: f32[128,32], index: 7, kind: input, shape index: {}]
  %s8 = inlined_call_operand.vmem [shape: f32[1,32], index: 8, kind: input, shape index: {}]
  %s9 = inlined_call_operand.hbm [shape: f32[4,8,32], index: 9, kind: output, shape index: {}]
  %s10 = sld [smem:[#allocation0]]
  $region69: #{tpu_custom_call.1} parent=0
    _
  %s12 = ssub.s32 1, %s10
  %s13 = scalar_select 0, %s12, %s10
  $region1: #{tpu_custom_call.1} parent=0
    #allocation2 [shape = 'u8[8192]{0}', space=vmem, size = 0x2000, scoped, tag = 'output window, operand 0']
    #allocation3 [shape = 's32[2]{0}', space=sflag, size = 0x8, scoped, tag = 'scoped memory for tpu_custom_call.1']
    %14 = vsyncpa [#allocation3], 0
    %s15 = scalar_lea.sflag [#allocation3], 1
    %16 = vsyncpa %s15, 0
    loop: start=0, step=1, limit=6
    $region2: #{tpu_custom_call.1} parent=1 // loop_pre_header
      _
    $region3: #{tpu_custom_call.1} parent=1 // loop_header
      %s18 = sphi 0, %s22
      %p19 = scmp.ge.s32.totalorder %s18, 6
      %s28 = sphi 0, %s30
      %s31 = sphi 0, %s28
      %s32 = sphi 0, %s31
      %s48 = sphi 0, %s32
      %s52 = sphi 0, %s52
      %s54 = sphi 0, %s52
      %s55 = sphi 0, %s54
      %s69 = sphi 0, %s55
      %s73 = sphi 0, %s73
      %s75 = sphi 0, %s73
      %s76 = sphi 0, %s75
      %s90 = sphi 0, %s76
      %s94 = sphi 0, %s94
      %s96 = sphi 0, %s94
      %s97 = sphi 0, %s96
      %s111 = sphi 0, %s97
      %s115 = sphi 0, %s115
      %s117 = sphi 0, %s115
      %s118 = sphi 0, %s117
      %s132 = sphi 0, %s118
      %s136 = sphi 0, %s136
      %s138 = sphi 0, %s136
      %s139 = sphi 0, %s138
      %s153 = sphi 0, %s139
      %s157 = sphi 0, %s157
      %s159 = sphi 0, %s157
      %s160 = sphi 0, %s159
      %s174 = sphi 0, %s160
      %s178 = sphi 0, %s178
      %s180 = sphi 0, %s178
      %s181 = sphi 0, %s180
      %s195 = sphi 0, %s181
      %s199 = sphi 0, %s199
      %s201 = sphi 0, %s199
      %s202 = sphi 0, %s201
      %s216 = sphi 0, %s202
      %s222 = sphi 0, %s224
      %s225 = sphi 0, %s222
      %s226 = sphi 0, %s225
      %s242 = sphi 0, %s226
    $region4: #{tpu_custom_call.1} parent=1 // loop_header_branch
      %21 = sbr.rel (%p19) target = $region8
    $region5: #{tpu_custom_call.1} parent=1 // loop_body
      %s23 = ssub.s32 %s18, 1
      %s24 = ssub.s32 %s18, 2
      %s25 = sadd.s32 %s18, 1
      %s26 = ssub.s32 %s18, %s25
      %p27 = scmp.eq.s32.totalorder %s26, 0
      %s29 = sadd.s32 %s28, 1
      %s30 = scalar_select %p27, %s28, %s29
      %p33 = pneg %p27
      %p34 = scmp.eq.s32.totalorder %s18, 3
      %p35 = por %p33, %p34
      %p36 = scmp.ne.s32.totalorder %s28, %s31
      %p37 = scmp.eq.s32.totalorder %s18, 0
      %p38 = por %p36, %p37
      %p39 = scmp.ne.s32.totalorder %s28, %s31
      %p40 = scmp.eq.s32.totalorder %s23, 3
      %p41 = por %p39, %p40
      %p42 = scmp.ne.s32.totalorder %s31, %s32
      %p43 = scmp.eq.s32.totalorder %s23, 0
      %p44 = por %p42, %p43
      %p45 = scmp.ne.s32.totalorder %s31, %s32
      %p46 = scmp.eq.s32.totalorder %s24, 3
      %p47 = por %p45, %p46
      %p49 = scmp.ne.s32.totalorder %s32, %s48
      %p50 = scmp.eq.s32.totalorder %s24, 0
      %p51 = por %p49, %p50
      %s53 = sadd.s32 %s52, 1
      %p56 = scmp.eq.s32.totalorder %s18, 3
      %p57 = scmp.ne.s32.totalorder %s52, %s54
      %p58 = scmp.eq.s32.totalorder %s18, 0
      %p59 = por %p57, %p58
      %p60 = scmp.ne.s32.totalorder %s52, %s54
      %p61 = scmp.eq.s32.totalorder %s23, 3
      %p62 = por %p60, %p61
      %p63 = scmp.ne.s32.totalorder %s54, %s55
      %p64 = scmp.eq.s32.totalorder %s23, 0
      %p65 = por %p63, %p64
      %p66 = scmp.ne.s32.totalorder %s54, %s55
      %p67 = scmp.eq.s32.totalorder %s24, 3
      %p68 = por %p66, %p67
      %p70 = scmp.ne.s32.totalorder %s55, %s69
      %p71 = scmp.eq.s32.totalorder %s24, 0
      %p72 = por %p70, %p71
      %s74 = sadd.s32 %s73, 1
      %p77 = scmp.eq.s32.totalorder %s18, 3
      %p78 = scmp.ne.s32.totalorder %s73, %s75
      %p79 = scmp.eq.s32.totalorder %s18, 0
      %p80 = por %p78, %p79
      %p81 = scmp.ne.s32.totalorder %s73, %s75
      %p82 = scmp.eq.s32.totalorder %s23, 3
      %p83 = por %p81, %p82
      %p84 = scmp.ne.s32.totalorder %s75, %s76
      %p85 = scmp.eq.s32.totalorder %s23, 0
      %p86 = por %p84, %p85
      %p87 = scmp.ne.s32.totalorder %s75, %s76
      %p88 = scmp.eq.s32.totalorder %s24, 3
      %p89 = por %p87, %p88
      %p91 = scmp.ne.s32.totalorder %s76, %s90
      %p92 = scmp.eq.s32.totalorder %s24, 0
      %p93 = por %p91, %p92
      %s95 = sadd.s32 %s94, 1
      %p98 = scmp.eq.s32.totalorder %s18, 3
      %p99 = scmp.ne.s32.totalorder %s94, %s96
      %p100 = scmp.eq.s32.totalorder %s18, 0
      %p101 = por %p99, %p100
      %p102 = scmp.ne.s32.totalorder %s94, %s96
      %p103 = scmp.eq.s32.totalorder %s23, 3
      %p104 = por %p102, %p103
      %p105 = scmp.ne.s32.totalorder %s96, %s97
      %p106 = scmp.eq.s32.totalorder %s23, 0
      %p107 = por %p105, %p106
      %p108 = scmp.ne.s32.totalorder %s96, %s97
      %p109 = scmp.eq.s32.totalorder %s24, 3
      %p110 = por %p108, %p109
      %p112 = scmp.ne.s32.totalorder %s97, %s111
      %p113 = scmp.eq.s32.totalorder %s24, 0
      %p114 = por %p112, %p113
      %s116 = sadd.s32 %s115, 1
      %p119 = scmp.eq.s32.totalorder %s18, 3
      %p120 = scmp.ne.s32.totalorder %s115, %s117
      %p121 = scmp.eq.s32.totalorder %s18, 0
      %p122 = por %p120, %p121
      %p123 = scmp.ne.s32.totalorder %s115, %s117
      %p124 = scmp.eq.s32.totalorder %s23, 3
      %p125 = por %p123, %p124
      %p126 = scmp.ne.s32.totalorder %s117, %s118
      %p127 = scmp.eq.s32.totalorder %s23, 0
      %p128 = por %p126, %p127
      %p129 = scmp.ne.s32.totalorder %s117, %s118
      %p130 = scmp.eq.s32.totalorder %s24, 3
      %p131 = por %p129, %p130
      %p133 = scmp.ne.s32.totalorder %s118, %s132
      %p134 = scmp.eq.s32.totalorder %s24, 0
      %p135 = por %p133, %p134
      %s137 = sadd.s32 %s136, 1
      %p140 = scmp.eq.s32.totalorder %s18, 3
      %p141 = scmp.ne.s32.totalorder %s136, %s138
      %p142 = scmp.eq.s32.totalorder %s18, 0
      %p143 = por %p141, %p142
      %p144 = scmp.ne.s32.totalorder %s136, %s138
      %p145 = scmp.eq.s32.totalorder %s23, 3
      %p146 = por %p144, %p145
      %p147 = scmp.ne.s32.totalorder %s138, %s139
      %p148 = scmp.eq.s32.totalorder %s23, 0
      %p149 = por %p147, %p148
      %p150 = scmp.ne.s32.totalorder %s138, %s139
      %p151 = scmp.eq.s32.totalorder %s24, 3
      %p152 = por %p150, %p151
      %p154 = scmp.ne.s32.totalorder %s139, %s153
      %p155 = scmp.eq.s32.totalorder %s24, 0
      %p156 = por %p154, %p155
      %s158 = sadd.s32 %s157, 1
      %p161 = scmp.eq.s32.totalorder %s18, 3
      %p162 = scmp.ne.s32.totalorder %s157, %s159
      %p163 = scmp.eq.s32.totalorder %s18, 0
      %p164 = por %p162, %p163
      %p165 = scmp.ne.s32.totalorder %s157, %s159
      %p166 = scmp.eq.s32.totalorder %s23, 3
      %p167 = por %p165, %p166
      %p168 = scmp.ne.s32.totalorder %s159, %s160
      %p169 = scmp.eq.s32.totalorder %s23, 0
      %p170 = por %p168, %p169
      %p171 = scmp.ne.s32.totalorder %s159, %s160
      %p172 = scmp.eq.s32.totalorder %s24, 3
      %p173 = por %p171, %p172
      %p175 = scmp.ne.s32.totalorder %s160, %s174
      %p176 = scmp.eq.s32.totalorder %s24, 0
      %p177 = por %p175, %p176
      %s179 = sadd.s32 %s178, 1
      %p182 = scmp.eq.s32.totalorder %s18, 3
      %p183 = scmp.ne.s32.totalorder %s178, %s180
      %p184 = scmp.eq.s32.totalorder %s18, 0
      %p185 = por %p183, %p184
      %p186 = scmp.ne.s32.totalorder %s178, %s180
      %p187 = scmp.eq.s32.totalorder %s23, 3
      %p188 = por %p186, %p187
      %p189 = scmp.ne.s32.totalorder %s180, %s181
      %p190 = scmp.eq.s32.totalorder %s23, 0
      %p191 = por %p189, %p190
      %p192 = scmp.ne.s32.totalorder %s180, %s181
      %p193 = scmp.eq.s32.totalorder %s24, 3
      %p194 = por %p192, %p193
      %p196 = scmp.ne.s32.totalorder %s181, %s195
      %p197 = scmp.eq.s32.totalorder %s24, 0
      %p198 = por %p196, %p197
      %s200 = sadd.s32 %s199, 1
      %p203 = scmp.eq.s32.totalorder %s18, 3
      %p204 = scmp.ne.s32.totalorder %s199, %s201
      %p205 = scmp.eq.s32.totalorder %s18, 0
      %p206 = por %p204, %p205
      %p207 = scmp.ne.s32.totalorder %s199, %s201
      %p208 = scmp.eq.s32.totalorder %s23, 3
      %p209 = por %p207, %p208
      %p210 = scmp.ne.s32.totalorder %s201, %s202
      %p211 = scmp.eq.s32.totalorder %s23, 0
      %p212 = por %p210, %p211
      %p213 = scmp.ne.s32.totalorder %s201, %s202
      %p214 = scmp.eq.s32.totalorder %s24, 3
      %p215 = por %p213, %p214
      %p217 = scmp.ne.s32.totalorder %s202, %s216
      %p218 = scmp.eq.s32.totalorder %s24, 0
      %p219 = por %p217, %p218
      %s220 = ssub.s32 %s18, %s25
      %p221 = scmp.eq.s32.totalorder %s220, 0
      %s223 = sadd.s32 %s222, 1
      %s224 = scalar_select %p221, %s222, %s223
      %p227 = pneg %p221
      %p228 = scmp.eq.s32.totalorder %s18, 3
      %p229 = por %p227, %p228
      %p230 = scmp.ne.s32.totalorder %s222, %s225
      %p231 = scmp.eq.s32.totalorder %s18, 0
      %p232 = por %p230, %p231
      %p233 = scmp.ne.s32.totalorder %s222, %s225
      %p234 = scmp.eq.s32.totalorder %s23, 3
      %p235 = por %p233, %p234
      %p236 = scmp.ne.s32.totalorder %s225, %s226
      %p237 = scmp.eq.s32.totalorder %s23, 0
      %p238 = por %p236, %p237
      %p239 = scmp.ne.s32.totalorder %s225, %s226
      %p240 = scmp.eq.s32.totalorder %s24, 3
      %p241 = por %p239, %p240
      %p243 = scmp.ne.s32.totalorder %s226, %s242
      %p244 = scmp.eq.s32.totalorder %s24, 0
      %p245 = por %p243, %p244
      %p246 = scmp.le.s32.totalorder 1, %s18
      %p247 = scmp.lt.s32.totalorder %s18, 5
      %p248 = pnand %p246, %p247
      %p249 = pneg %p248
      // Predicated region
      $region9: #{tpu_custom_call.1} parent=5 // pred_check
        _
      $region10: #{tpu_custom_call.1} parent=5 // pred_check_branch
        %251 = sbr.rel (%p248) target = $region12
      $region11: #{tpu_custom_call.1} parent=5 // pred_region
        %s252 = ssub.s32 %s18, 1
        // Predicated region
        $region13: #{tpu_custom_call.1} parent=11 // pred_check
          %p253 = pneg %p65
        $region14: #{tpu_custom_call.1} parent=11 // pred_check_branch
          %255 = sbr.rel (%p253) target = $region16
        $region15: #{tpu_custom_call.1} parent=11 // pred_region
          _
        $region16: #{tpu_custom_call.1} parent=11 // pred_fallthru
          _
        // Predicated region
        $region17: #{tpu_custom_call.1} parent=11 // pred_check
          %p256 = pneg %p86
        $region18: #{tpu_custom_call.1} parent=11 // pred_check_branch
          %258 = sbr.rel (%p256) target = $region20
        $region19: #{tpu_custom_call.1} parent=11 // pred_region
          _
        $region20: #{tpu_custom_call.1} parent=11 // pred_fallthru
          _
        // Predicated region
        $region21: #{tpu_custom_call.1} parent=11 // pred_check
          %p259 = pneg %p107
        $region22: #{tpu_custom_call.1} parent=11 // pred_check_branch
          %261 = sbr.rel (%p259) target = $region24
        $region23: #{tpu_custom_call.1} parent=11 // pred_region
          _
        $region24: #{tpu_custom_call.1} parent=11 // pred_fallthru
          _
        // Predicated region
        $region25: #{tpu_custom_call.1} parent=11 // pred_check
          %p262 = pneg %p128
        $region26: #{tpu_custom_call.1} parent=11 // pred_check_branch
          %264 = sbr.rel (%p262) target = $region28
        $region27: #{tpu_custom_call.1} parent=11 // pred_region
          _
        $region28: #{tpu_custom_call.1} parent=11 // pred_fallthru
          _
        // Predicated region
        $region29: #{tpu_custom_call.1} parent=11 // pred_check
          %p265 = pneg %p149
        $region30: #{tpu_custom_call.1} parent=11 // pred_check_branch
          %267 = sbr.rel (%p265) target = $region32
        $region31: #{tpu_custom_call.1} parent=11 // pred_region
          _
        $region32: #{tpu_custom_call.1} parent=11 // pred_fallthru
          _
        // Predicated region
        $region33: #{tpu_custom_call.1} parent=11 // pred_check
          %p268 = pneg %p170
        $region34: #{tpu_custom_call.1} parent=11 // pred_check_branch
          %270 = sbr.rel (%p268) target = $region36
        $region35: #{tpu_custom_call.1} parent=11 // pred_region
          _
        $region36: #{tpu_custom_call.1} parent=11 // pred_fallthru
          _
        // Predicated region
        $region37: #{tpu_custom_call.1} parent=11 // pred_check
          %p271 = pneg %p191
        $region38: #{tpu_custom_call.1} parent=11 // pred_check_branch
          %273 = sbr.rel (%p271) target = $region40
        $region39: #{tpu_custom_call.1} parent=11 // pred_region
          _
        $region40: #{tpu_custom_call.1} parent=11 // pred_fallthru
          _
        // Predicated region
        $region41: #{tpu_custom_call.1} parent=11 // pred_check
          %p274 = pneg %p212
        $region42: #{tpu_custom_call.1} parent=11 // pred_check_branch
          %276 = sbr.rel (%p274) target = $region44
        $region43: #{tpu_custom_call.1} parent=11 // pred_region
          _
        $region44: #{tpu_custom_call.1} parent=11 // pred_fallthru
          _
      $region12: #{tpu_custom_call.1} parent=5 // pred_fallthru
        _
      %p277 = scmp.lt.s32.totalorder %s18, 4
      // Predicated region
      $region45: #{tpu_custom_call.1} parent=5 // pred_check
        %p278 = pneg %p277
      $region46: #{tpu_custom_call.1} parent=5 // pred_check_branch
        %280 = sbr.rel (%p278) target = $region48
      $region47: #{tpu_custom_call.1} parent=5 // pred_region
        // Predicated region
        $region49: #{tpu_custom_call.1} parent=47 // pred_check
          %p281 = pneg %p38
        $region50: #{tpu_custom_call.1} parent=47 // pred_check_branch
          %283 = sbr.rel (%p281) target = $region52
        $region51: #{tpu_custom_call.1} parent=47 // pred_region
          %p284 = scmp.lt.s32.totalorder %s18, 3
          %s285 = scalar_select %p284, %s18, 3
          %s286 = smul.addr %s285, 8
          %s287 = scalar_lea.vmem %s0, %s286
        $region52: #{tpu_custom_call.1} parent=47 // pred_fallthru
          _
      $region48: #{tpu_custom_call.1} parent=5 // pred_fallthru
        _
      %p288 = scmp.le.s32.totalorder 1, %s18
      %p289 = scmp.lt.s32.totalorder %s18, 5
      %p290 = pnand %p288, %p289
      %p291 = pneg %p290
      // Predicated region
      $region53: #{tpu_custom_call.1} parent=5 // pred_check
        _
      $region54: #{tpu_custom_call.1} parent=5 // pred_check_branch
        %293 = sbr.rel (%p290) target = $region56
      $region55: #{tpu_custom_call.1} parent=5 // pred_region
        %s294 = ssub.s32 %s18, 1
        %p295 = scmp.lt.s32.totalorder %s23, 3
        %s296 = scalar_select %p295, %s23, 3
        %s297 = smul.addr %s296, 8
        %s298 = scalar_lea.vmem %s0, %s297
        %p299 = pneg %p44
        %p300 = pneg %p41
        %p301 = pneg %p65
        %p302 = pneg %p62
        %p303 = pneg %p86
        %p304 = pneg %p83
        %p305 = pneg %p107
        %p306 = pneg %p104
        %p307 = pneg %p128
        %p308 = pneg %p125
        %p309 = pneg %p149
        %p310 = pneg %p146
        %p311 = pneg %p170
        %p312 = pneg %p167
        %p313 = pneg %p191
        %p314 = pneg %p188
        %p315 = pneg %p212
        %p316 = pneg %p209
        %p317 = pneg %p238
        %p318 = pneg %p235
        %s319 = sand.u32 %s225, 1
        %s320 = scalar_lea.sflag [#allocation3], %s319
        %s321 = sand.u32 %s225, 1
        %s322 = smul.addr %s321, 8
        %s323 = scalar_lea.vmem [#allocation2], %s322
        %p324 = scmp.lt.s32.totalorder %s23, 3
        %s325 = scalar_select %p324, %s23, 3
        %s326 = smul.addr %s325, 8
        %s327 = scalar_lea.vmem %s0, %s326
        %v328 = vld [vmem:[%s327] sm:$0xff]
        %v329 = vld [vmem:[%s1] sm:$0xff]
        %v330 = vld [vmem:[%s1 + $0x8] sm:$0xff]
        %v331 = vld [vmem:[%s1 + $0x10] sm:$0xff]
        %v332 = vld [vmem:[%s1 + $0x18] sm:$0xff]
        %v333 = vld [vmem:[%s2] sm:$0x1]
        %v335 = vlaneseq
        %v336 = vshrl.u32 %v335, 7
        %v337 = vsub.s32 0, %v336
        %v338 = vrot.slane %v333, %v337
        %vm340 = vcmask 261120
        %v342 = vsel %vm340, %v328, 0
        %344 = vmatprep.subr.mxu0 0.0
        %345 = vmatpush1.msra.mxu0 %v329
        %346 = vmatprep.subr.mxu0 0.0
        %347 = vmatpush1.msra.mxu0 %v330
        %348 = vmatprep.subr.mxu0 0.0
        %349 = vmatpush1.msra.mxu0 %v331
        %350 = vmatprep.subr.mxu0 0.0
        %351 = vmatpush1.msra.mxu0 %v332
        %352 = vmatprep.subr.mxu0 0.0
        %353 = vmatpush1.msra.mxu0 0.0
        %354 = vmatprep.subr.mxu0 0.0
        %355 = vmatpush1.msra.mxu0 0.0
        %356 = vmatprep.subr.mxu0 0.0
        %357 = vmatpush1.msra.mxu0 0.0
        %358 = vmatprep.subr.mxu0 0.0
        %359 = vmatpush1.msra.mxu0 0.0
        %360 = vmatprep.subr.mxu0 0.0
        %361 = vmatpush1.msra.mxu0 0.0
        %362 = vmatprep.subr.mxu0 0.0
        %363 = vmatpush1.msra.mxu0 0.0
        %364 = vmatprep.subr.mxu0 0.0
        %365 = vmatpush1.msra.mxu0 0.0
        %366 = vmatprep.subr.mxu0 0.0
        %367 = vmatpush1.msra.mxu0 0.0
        %368 = vmatprep.subr.mxu0 0.0
        %369 = vmatpush1.msra.mxu0 0.0
        %370 = vmatprep.subr.mxu0 0.0
        %371 = vmatpush1.msra.mxu0 0.0
        %372 = vmatprep.subr.mxu0 0.0
        %373 = vmatpush1.msra.mxu0 0.0
        %374 = vmatprep.subr.mxu0 0.0
        %375 = vmatpush1.msra.mxu0 0.0
        %376 = vmatprep.subr.mxu0 0.0
        %377 = vmatpush1.msra.mxu0 0.0
        %378 = vmatprep.subr.mxu0 0.0
        %379 = vmatpush1.msra.mxu0 0.0
        %380 = vmatprep.subr.mxu0 0.0
        %381 = vmatpush1.msra.mxu0 0.0
        %382 = vmatprep.subr.mxu0 0.0
        %383 = vmatpush1.msra.mxu0 0.0
        %384 = vmatprep.subr.mxu0 0.0
        %385 = vmatpush1.msra.mxu0 0.0
        %386 = vmatprep.subr.mxu0 0.0
        %387 = vmatpush1.msra.mxu0 0.0
        %388 = vmatprep.subr.mxu0 0.0
        %389 = vmatpush1.msra.mxu0 0.0
        %390 = vmatprep.subr.mxu0 0.0
        %391 = vmatpush1.msra.mxu0 0.0
        %392 = vmatprep.subr.mxu0 0.0
        %393 = vmatpush1.msra.mxu0 0.0
        %394 = vmatprep.subr.mxu0 0.0
        %395 = vmatpush1.msra.mxu0 0.0
        %396 = vmatprep.subr.mxu0 0.0
        %397 = vmatpush1.msra.mxu0 0.0
        %398 = vmatprep.subr.mxu0 0.0
        %399 = vmatpush1.msra.mxu0 0.0
        %400 = vmatprep.subr.mxu0 0.0
        %401 = vmatpush1.msra.mxu0 0.0
        %402 = vmatprep.subr.mxu0 0.0
        %403 = vmatpush1.msra.mxu0 0.0
        %404 = vmatprep.subr.mxu0 0.0
        %405 = vmatpush1.msra.mxu0 0.0
        %406 = vmatprep.subr.mxu0 0.0
        %407 = vmatpush1.msra.mxu0 0.0
        %408 = vmatprep.mubr.f32.mxu0 0.0
        %409 = vmatmul.mubr.f32.gmra.mrb[0].mxu0 %v342
        %v410 = vpop.f32.mrb[0].mxu0
        %v411 = vadd.f32 %v338, %v410
        %v412 = vpop.f32.mrb[0].mxu0
        %413 = vdwg.mxu0
        %415 = vrot.lane.b32.xlu0 %v411, 96
        %v416 = vpop.permute.xlu0 %415
        %vm417 = vcmask 64512
        %v418 = vsel %vm417, %v411, 0
        %v420 = vsel %vm417, %v416, 0
        %422 = vmatprep.subr.mxu0 0.0
        %423 = vmatpush1.xpose.msra.mxu0 %v420
        %424 = vmatprep.subr.mxu0 0.0
        %425 = vmatpush1.xpose.msra.mxu0 0.0
        %426 = vmatprep.subr.mxu0 0.0
        %427 = vmatpush1.xpose.msra.mxu0 0.0
        %428 = vmatprep.subr.mxu0 0.0
        %429 = vmatpush1.xpose.msra.mxu0 0.0
        %430 = vmatprep.subr.mxu0 0.0
        %431 = vmatpush1.xpose.msra.mxu0 0.0
        %432 = vmatprep.subr.mxu0 0.0
        %433 = vmatpush1.xpose.msra.mxu0 0.0
        %434 = vmatprep.subr.mxu0 0.0
        %435 = vmatpush1.xpose.msra.mxu0 0.0
        %436 = vmatprep.subr.mxu0 0.0
        %437 = vmatpush1.xpose.msra.mxu0 0.0
        %438 = vmatprep.subr.mxu0 0.0
        %439 = vmatpush1.xpose.msra.mxu0 0.0
        %440 = vmatprep.subr.mxu0 0.0
        %441 = vmatpush1.xpose.msra.mxu0 0.0
        %442 = vmatprep.subr.mxu0 0.0
        %443 = vmatpush1.xpose.msra.mxu0 0.0
        %444 = vmatprep.subr.mxu0 0.0
        %445 = vmatpush1.xpose.msra.mxu0 0.0
        %446 = vmatprep.subr.mxu0 0.0
        %447 = vmatpush1.xpose.msra.mxu0 0.0
        %448 = vmatprep.subr.mxu0 0.0
        %449 = vmatpush1.xpose.msra.mxu0 0.0
        %450 = vmatprep.subr.mxu0 0.0
        %451 = vmatpush1.xpose.msra.mxu0 0.0
        %452 = vmatprep.subr.mxu0 0.0
        %453 = vmatpush1.xpose.msra.mxu0 0.0
        %454 = vmatprep.subr.mxu0 0.0
        %455 = vmatpush1.xpose.msra.mxu0 0.0
        %456 = vmatprep.subr.mxu0 0.0
        %457 = vmatpush1.xpose.msra.mxu0 0.0
        %458 = vmatprep.subr.mxu0 0.0
        %459 = vmatpush1.xpose.msra.mxu0 0.0
        %460 = vmatprep.subr.mxu0 0.0
        %461 = vmatpush1.xpose.msra.mxu0 0.0
        %462 = vmatprep.subr.mxu0 0.0
        %463 = vmatpush1.xpose.msra.mxu0 0.0
        %464 = vmatprep.subr.mxu0 0.0
        %465 = vmatpush1.xpose.msra.mxu0 0.0
        %466 = vmatprep.subr.mxu0 0.0
        %467 = vmatpush1.xpose.msra.mxu0 0.0
        %468 = vmatprep.subr.mxu0 0.0
        %469 = vmatpush1.xpose.msra.mxu0 0.0
        %470 = vmatprep.subr.mxu0 0.0
        %471 = vmatpush1.xpose.msra.mxu0 0.0
        %472 = vmatprep.subr.mxu0 0.0
        %473 = vmatpush1.xpose.msra.mxu0 0.0
        %474 = vmatprep.subr.mxu0 0.0
        %475 = vmatpush1.xpose.msra.mxu0 0.0
        %476 = vmatprep.subr.mxu0 0.0
        %477 = vmatpush1.xpose.msra.mxu0 0.0
        %478 = vmatprep.subr.mxu0 0.0
        %479 = vmatpush1.xpose.msra.mxu0 0.0
        %480 = vmatprep.subr.mxu0 0.0
        %481 = vmatpush1.xpose.msra.mxu0 0.0
        %482 = vmatprep.subr.mxu0 0.0
        %483 = vmatpush1.xpose.msra.mxu0 0.0
        %484 = vmatprep.subr.mxu0 0.0
        %485 = vmatpush1.xpose.msra.mxu0 0.0
        %486 = vmatprep.mubr.f32.mxu0 0.0
        %487 = vmatmul.mubr.f32.gmra.mrb[0].mxu0 %v418
        %v488 = vpop.f32.mrb[0].mxu0
        %v489 = vadd.f32 0.0, %v488
        %v490 = vpop.f32.mrb[0].mxu0
        %491 = vdwg.mxu0
        %v492 = vsel %vm417, %v489, -inf
        %493 = vmax.xlane.f32.xlu0 %v492
        %v494 = vpop.xlane.xlu0 %493
        %v495 = vsub.f32 %v489, %v494
        %v496 = vmul.f32 %v495, 1.442695
        %v497 = vpow.pop %v496
        %v498 = vsel %vm417, %v497, 0.0
        %499 = vadd.xlane.f32.xlu0 %v498
        %v500 = vpop.xlane.xlu0 %499
        %v501 = vrcp.pop %v500
        %v502 = vmul.f32 %v497, %v501
        %503 = vrot.lane.b32.xlu0 %v411, 64
        %v504 = vpop.permute.xlu0 %503
        %v507 = vsel %vm417, %v502, 0
        %509 = vmatprep.subr.mxu0 0.0
        %510 = vmatpush1.msra.mxu0 %v504
        %511 = vmatprep.subr.mxu0 0.0
        %512 = vmatpush1.msra.mxu0 0.0
        %513 = vmatprep.subr.mxu0 0.0
        %514 = vmatpush1.msra.mxu0 0.0
        %515 = vmatprep.subr.mxu0 0.0
        %516 = vmatpush1.msra.mxu0 0.0
        %517 = vmatprep.subr.mxu0 0.0
        %518 = vmatpush1.msra.mxu0 0.0
        %519 = vmatprep.subr.mxu0 0.0
        %520 = vmatpush1.msra.mxu0 0.0
        %521 = vmatprep.subr.mxu0 0.0
        %522 = vmatpush1.msra.mxu0 0.0
        %523 = vmatprep.subr.mxu0 0.0
        %524 = vmatpush1.msra.mxu0 0.0
        %525 = vmatprep.subr.mxu0 0.0
        %526 = vmatpush1.msra.mxu0 0.0
        %527 = vmatprep.subr.mxu0 0.0
        %528 = vmatpush1.msra.mxu0 0.0
        %529 = vmatprep.subr.mxu0 0.0
        %530 = vmatpush1.msra.mxu0 0.0
        %531 = vmatprep.subr.mxu0 0.0
        %532 = vmatpush1.msra.mxu0 0.0
        %533 = vmatprep.subr.mxu0 0.0
        %534 = vmatpush1.msra.mxu0 0.0
        %535 = vmatprep.subr.mxu0 0.0
        %536 = vmatpush1.msra.mxu0 0.0
        %537 = vmatprep.subr.mxu0 0.0
        %538 = vmatpush1.msra.mxu0 0.0
        %539 = vmatprep.subr.mxu0 0.0
        %540 = vmatpush1.msra.mxu0 0.0
        %541 = vmatprep.subr.mxu0 0.0
        %542 = vmatpush1.msra.mxu0 0.0
        %543 = vmatprep.subr.mxu0 0.0
        %544 = vmatpush1.msra.mxu0 0.0
        %545 = vmatprep.subr.mxu0 0.0
        %546 = vmatpush1.msra.mxu0 0.0
        %547 = vmatprep.subr.mxu0 0.0
        %548 = vmatpush1.msra.mxu0 0.0
        %549 = vmatprep.subr.mxu0 0.0
        %550 = vmatpush1.msra.mxu0 0.0
        %551 = vmatprep.subr.mxu0 0.0
        %552 = vmatpush1.msra.mxu0 0.0
        %553 = vmatprep.subr.mxu0 0.0
        %554 = vmatpush1.msra.mxu0 0.0
        %555 = vmatprep.subr.mxu0 0.0
        %556 = vmatpush1.msra.mxu0 0.0
        %557 = vmatprep.subr.mxu0 0.0
        %558 = vmatpush1.msra.mxu0 0.0
        %559 = vmatprep.subr.mxu0 0.0
        %560 = vmatpush1.msra.mxu0 0.0
        %561 = vmatprep.subr.mxu0 0.0
        %562 = vmatpush1.msra.mxu0 0.0
        %563 = vmatprep.subr.mxu0 0.0
        %564 = vmatpush1.msra.mxu0 0.0
        %565 = vmatprep.subr.mxu0 0.0
        %566 = vmatpush1.msra.mxu0 0.0
        %567 = vmatprep.subr.mxu0 0.0
        %568 = vmatpush1.msra.mxu0 0.0
        %569 = vmatprep.subr.mxu0 0.0
        %570 = vmatpush1.msra.mxu0 0.0
        %571 = vmatprep.subr.mxu0 0.0
        %572 = vmatpush1.msra.mxu0 0.0
        %573 = vmatprep.mubr.f32.mxu0 0.0
        %574 = vmatmul.mubr.f32.gmra.mrb[0].mxu0 %v507
        %v575 = vpop.f32.mrb[0].mxu0
        %v576 = vadd.f32 0.0, %v575
        %v577 = vpop.f32.mrb[0].mxu0
        %578 = vdwg.mxu0
        %v579 = vld [vmem:[%s3] sm:$0xff]
        %580 = vrot.lane.b32.xlu0 %v411, 120
        %v581 = vpop.permute.xlu0 %580
        %582 = vrot.lane.b32.xlu0 %v411, 88
        %v583 = vpop.permute.xlu0 %582
        %v584 = vsel %vm417, %v581, 0
        %v586 = vsel %vm417, %v583, 0
        %588 = vmatprep.subr.mxu0 0.0
        %589 = vmatpush1.xpose.msra.mxu0 %v586
        %590 = vmatprep.subr.mxu0 0.0
        %591 = vmatpush1.xpose.msra.mxu0 0.0
        %592 = vmatprep.subr.mxu0 0.0
        %593 = vmatpush1.xpose.msra.mxu0 0.0
        %594 = vmatprep.subr.mxu0 0.0
        %595 = vmatpush1.xpose.msra.mxu0 0.0
        %596 = vmatprep.subr.mxu0 0.0
        %597 = vmatpush1.xpose.msra.mxu0 0.0
        %598 = vmatprep.subr.mxu0 0.0
        %599 = vmatpush1.xpose.msra.mxu0 0.0
        %600 = vmatprep.subr.mxu0 0.0
        %601 = vmatpush1.xpose.msra.mxu0 0.0
        %602 = vmatprep.subr.mxu0 0.0
        %603 = vmatpush1.xpose.msra.mxu0 0.0
        %604 = vmatprep.subr.mxu0 0.0
        %605 = vmatpush1.xpose.msra.mxu0 0.0
        %606 = vmatprep.subr.mxu0 0.0
        %607 = vmatpush1.xpose.msra.mxu0 0.0
        %608 = vmatprep.subr.mxu0 0.0
        %609 = vmatpush1.xpose.msra.mxu0 0.0
        %610 = vmatprep.subr.mxu0 0.0
        %611 = vmatpush1.xpose.msra.mxu0 0.0
        %612 = vmatprep.subr.mxu0 0.0
        %613 = vmatpush1.xpose.msra.mxu0 0.0
        %614 = vmatprep.subr.mxu0 0.0
        %615 = vmatpush1.xpose.msra.mxu0 0.0
        %616 = vmatprep.subr.mxu0 0.0
        %617 = vmatpush1.xpose.msra.mxu0 0.0
        %618 = vmatprep.subr.mxu0 0.0
        %619 = vmatpush1.xpose.msra.mxu0 0.0
        %620 = vmatprep.subr.mxu0 0.0
        %621 = vmatpush1.xpose.msra.mxu0 0.0
        %622 = vmatprep.subr.mxu0 0.0
        %623 = vmatpush1.xpose.msra.mxu0 0.0
        %624 = vmatprep.subr.mxu0 0.0
        %625 = vmatpush1.xpose.msra.mxu0 0.0
        %626 = vmatprep.subr.mxu0 0.0
        %627 = vmatpush1.xpose.msra.mxu0 0.0
        %628 = vmatprep.subr.mxu0 0.0
        %629 = vmatpush1.xpose.msra.mxu0 0.0
        %630 = vmatprep.subr.mxu0 0.0
        %631 = vmatpush1.xpose.msra.mxu0 0.0
        %632 = vmatprep.subr.mxu0 0.0
        %633 = vmatpush1.xpose.msra.mxu0 0.0
        %634 = vmatprep.subr.mxu0 0.0
        %635 = vmatpush1.xpose.msra.mxu0 0.0
        %636 = vmatprep.subr.mxu0 0.0
        %637 = vmatpush1.xpose.msra.mxu0 0.0
        %638 = vmatprep.subr.mxu0 0.0
        %639 = vmatpush1.xpose.msra.mxu0 0.0
        %640 = vmatprep.subr.mxu0 0.0
        %641 = vmatpush1.xpose.msra.mxu0 0.0
        %642 = vmatprep.subr.mxu0 0.0
        %643 = vmatpush1.xpose.msra.mxu0 0.0
        %644 = vmatprep.subr.mxu0 0.0
        %645 = vmatpush1.xpose.msra.mxu0 0.0
        %646 = vmatprep.subr.mxu0 0.0
        %647 = vmatpush1.xpose.msra.mxu0 0.0
        %648 = vmatprep.subr.mxu0 0.0
        %649 = vmatpush1.xpose.msra.mxu0 0.0
        %650 = vmatprep.subr.mxu0 0.0
        %651 = vmatpush1.xpose.msra.mxu0 0.0
        %652 = vmatprep.mubr.f32.mxu0 0.0
        %653 = vmatmul.mubr.f32.gmra.mrb[0].mxu0 %v584
        %v654 = vpop.f32.mrb[0].mxu0
        %v655 = vadd.f32 0.0, %v654
        %v656 = vpop.f32.mrb[0].mxu0
        %657 = vdwg.mxu0
        %v658 = vsel %vm417, %v655, -inf
        %659 = vmax.xlane.f32.xlu0 %v658
        %v660 = vpop.xlane.xlu0 %659
        %v661 = vsub.f32 %v655, %v660
        %v662 = vmul.f32 %v661, 1.442695
        %v663 = vpow.pop %v662
        %v664 = vsel %vm417, %v663, 0.0
        %665 = vadd.xlane.f32.xlu0 %v664
        %v666 = vpop.xlane.xlu0 %665
        %v667 = vrcp.pop %v666
        %v668 = vmul.f32 %v663, %v667
        %669 = vrot.lane.b32.xlu0 %v411, 56
        %v670 = vpop.permute.xlu0 %669
        %v673 = vsel %vm417, %v668, 0
        %675 = vmatprep.subr.mxu0 0.0
        %676 = vmatpush1.msra.mxu0 %v670
        %677 = vmatprep.subr.mxu0 0.0
        %678 = vmatpush1.msra.mxu0 0.0
        %679 = vmatprep.subr.mxu0 0.0
        %680 = vmatpush1.msra.mxu0 0.0
        %681 = vmatprep.subr.mxu0 0.0
        %682 = vmatpush1.msra.mxu0 0.0
        %683 = vmatprep.subr.mxu0 0.0
        %684 = vmatpush1.msra.mxu0 0.0
        %685 = vmatprep.subr.mxu0 0.0
        %686 = vmatpush1.msra.mxu0 0.0
        %687 = vmatprep.subr.mxu0 0.0
        %688 = vmatpush1.msra.mxu0 0.0
        %689 = vmatprep.subr.mxu0 0.0
        %690 = vmatpush1.msra.mxu0 0.0
        %691 = vmatprep.subr.mxu0 0.0
        %692 = vmatpush1.msra.mxu0 0.0
        %693 = vmatprep.subr.mxu0 0.0
        %694 = vmatpush1.msra.mxu0 0.0
        %695 = vmatprep.subr.mxu0 0.0
        %696 = vmatpush1.msra.mxu0 0.0
        %697 = vmatprep.subr.mxu0 0.0
        %698 = vmatpush1.msra.mxu0 0.0
        %699 = vmatprep.subr.mxu0 0.0
        %700 = vmatpush1.msra.mxu0 0.0
        %701 = vmatprep.subr.mxu0 0.0
        %702 = vmatpush1.msra.mxu0 0.0
        %703 = vmatprep.subr.mxu0 0.0
        %704 = vmatpush1.msra.mxu0 0.0
        %705 = vmatprep.subr.mxu0 0.0
        %706 = vmatpush1.msra.mxu0 0.0
        %707 = vmatprep.subr.mxu0 0.0
        %708 = vmatpush1.msra.mxu0 0.0
        %709 = vmatprep.subr.mxu0 0.0
        %710 = vmatpush1.msra.mxu0 0.0
        %711 = vmatprep.subr.mxu0 0.0
        %712 = vmatpush1.msra.mxu0 0.0
        %713 = vmatprep.subr.mxu0 0.0
        %714 = vmatpush1.msra.mxu0 0.0
        %715 = vmatprep.subr.mxu0 0.0
        %716 = vmatpush1.msra.mxu0 0.0
        %717 = vmatprep.subr.mxu0 0.0
        %718 = vmatpush1.msra.mxu0 0.0
        %719 = vmatprep.subr.mxu0 0.0
        %720 = vmatpush1.msra.mxu0 0.0
        %721 = vmatprep.subr.mxu0 0.0
        %722 = vmatpush1.msra.mxu0 0.0
        %723 = vmatprep.subr.mxu0 0.0
        %724 = vmatpush1.msra.mxu0 0.0
        %725 = vmatprep.subr.mxu0 0.0
        %726 = vmatpush1.msra.mxu0 0.0
        %727 = vmatprep.subr.mxu0 0.0
        %728 = vmatpush1.msra.mxu0 0.0
        %729 = vmatprep.subr.mxu0 0.0
        %730 = vmatpush1.msra.mxu0 0.0
        %731 = vmatprep.subr.mxu0 0.0
        %732 = vmatpush1.msra.mxu0 0.0
        %733 = vmatprep.subr.mxu0 0.0
        %734 = vmatpush1.msra.mxu0 0.0
        %735 = vmatprep.subr.mxu0 0.0
        %736 = vmatpush1.msra.mxu0 0.0
        %737 = vmatprep.subr.mxu0 0.0
        %738 = vmatpush1.msra.mxu0 0.0
        %739 = vmatprep.mubr.f32.mxu0 0.0
        %740 = vmatmul.mubr.f32.gmra.mrb[0].mxu0 %v673
        %v741 = vpop.f32.mrb[0].mxu0
        %v742 = vadd.f32 0.0, %v741
        %v743 = vpop.f32.mrb[0].mxu0
        %744 = vdwg.mxu0
        %s745 = scalar_lea.vmem %s3, 8
        %v746 = vld [vmem:[%s745] sm:$0xff]
        %v748 = vsel %vm417, %v742, 0
        %750 = vmatprep.subr.mxu0 0.0
        %751 = vmatpush1.msra.mxu0 %v746
        %752 = vmatprep.subr.mxu0 0.0
        %753 = vmatpush1.msra.mxu0 0.0
        %754 = vmatprep.subr.mxu0 0.0
        %755 = vmatpush1.msra.mxu0 0.0
        %756 = vmatprep.subr.mxu0 0.0
        %757 = vmatpush1.msra.mxu0 0.0
        %758 = vmatprep.subr.mxu0 0.0
        %759 = vmatpush1.msra.mxu0 0.0
        %760 = vmatprep.subr.mxu0 0.0
        %761 = vmatpush1.msra.mxu0 0.0
        %762 = vmatprep.subr.mxu0 0.0
        %763 = vmatpush1.msra.mxu0 0.0
        %764 = vmatprep.subr.mxu0 0.0
        %765 = vmatpush1.msra.mxu0 0.0
        %766 = vmatprep.subr.mxu0 0.0
        %767 = vmatpush1.msra.mxu0 0.0
        %768 = vmatprep.subr.mxu0 0.0
        %769 = vmatpush1.msra.mxu0 0.0
        %770 = vmatprep.subr.mxu0 0.0
        %771 = vmatpush1.msra.mxu0 0.0
        %772 = vmatprep.subr.mxu0 0.0
        %773 = vmatpush1.msra.mxu0 0.0
        %774 = vmatprep.subr.mxu0 0.0
        %775 = vmatpush1.msra.mxu0 0.0
        %776 = vmatprep.subr.mxu0 0.0
        %777 = vmatpush1.msra.mxu0 0.0
        %778 = vmatprep.subr.mxu0 0.0
        %779 = vmatpush1.msra.mxu0 0.0
        %780 = vmatprep.subr.mxu0 0.0
        %781 = vmatpush1.msra.mxu0 0.0
        %782 = vmatprep.subr.mxu0 0.0
        %783 = vmatpush1.msra.mxu0 0.0
        %784 = vmatprep.subr.mxu0 0.0
        %785 = vmatpush1.msra.mxu0 0.0
        %786 = vmatprep.subr.mxu0 0.0
        %787 = vmatpush1.msra.mxu0 0.0
        %788 = vmatprep.subr.mxu0 0.0
        %789 = vmatpush1.msra.mxu0 0.0
        %790 = vmatprep.subr.mxu0 0.0
        %791 = vmatpush1.msra.mxu0 0.0
        %792 = vmatprep.subr.mxu0 0.0
        %793 = vmatpush1.msra.mxu0 0.0
        %794 = vmatprep.subr.mxu0 0.0
        %795 = vmatpush1.msra.mxu0 0.0
        %796 = vmatprep.subr.mxu0 0.0
        %797 = vmatpush1.msra.mxu0 0.0
        %798 = vmatprep.subr.mxu0 0.0
        %799 = vmatpush1.msra.mxu0 0.0
        %800 = vmatprep.subr.mxu0 0.0
        %801 = vmatpush1.msra.mxu0 0.0
        %802 = vmatprep.subr.mxu0 0.0
        %803 = vmatpush1.msra.mxu0 0.0
        %804 = vmatprep.subr.mxu0 0.0
        %805 = vmatpush1.msra.mxu0 0.0
        %806 = vmatprep.subr.mxu0 0.0
        %807 = vmatpush1.msra.mxu0 0.0
        %808 = vmatprep.subr.mxu0 0.0
        %809 = vmatpush1.msra.mxu0 0.0
        %810 = vmatprep.subr.mxu0 0.0
        %811 = vmatpush1.msra.mxu0 0.0
        %812 = vmatprep.subr.mxu0 0.0
        %813 = vmatpush1.msra.mxu0 0.0
        %814 = vmatprep.mubr.f32.mxu0 0.0
        %815 = vmatmul.mubr.f32.gmra.mrb[0].mxu0 %v748
        %v816 = vpop.f32.mrb[0].mxu0
        %v817 = vadd.f32 0.0, %v816
        %v818 = vpop.f32.mrb[0].mxu0
        %819 = vdwg.mxu0
        %v821 = vsel %vm417, %v576, 0
        %823 = vmatprep.subr.mxu0 0.0
        %824 = vmatpush1.msra.mxu0 %v579
        %825 = vmatprep.subr.mxu0 0.0
        %826 = vmatpush1.msra.mxu0 0.0
        %827 = vmatprep.subr.mxu0 0.0
        %828 = vmatpush1.msra.mxu0 0.0
        %829 = vmatprep.subr.mxu0 0.0
        %830 = vmatpush1.msra.mxu0 0.0
        %831 = vmatprep.subr.mxu0 0.0
        %832 = vmatpush1.msra.mxu0 0.0
        %833 = vmatprep.subr.mxu0 0.0
        %834 = vmatpush1.msra.mxu0 0.0
        %835 = vmatprep.subr.mxu0 0.0
        %836 = vmatpush1.msra.mxu0 0.0
        %837 = vmatprep.subr.mxu0 0.0
        %838 = vmatpush1.msra.mxu0 0.0
        %839 = vmatprep.subr.mxu0 0.0
        %840 = vmatpush1.msra.mxu0 0.0
        %841 = vmatprep.subr.mxu0 0.0
        %842 = vmatpush1.msra.mxu0 0.0
        %843 = vmatprep.subr.mxu0 0.0
        %844 = vmatpush1.msra.mxu0 0.0
        %845 = vmatprep.subr.mxu0 0.0
        %846 = vmatpush1.msra.mxu0 0.0
        %847 = vmatprep.subr.mxu0 0.0
        %848 = vmatpush1.msra.mxu0 0.0
        %849 = vmatprep.subr.mxu0 0.0
        %850 = vmatpush1.msra.mxu0 0.0
        %851 = vmatprep.subr.mxu0 0.0
        %852 = vmatpush1.msra.mxu0 0.0
        %853 = vmatprep.subr.mxu0 0.0
        %854 = vmatpush1.msra.mxu0 0.0
        %855 = vmatprep.subr.mxu0 0.0
        %856 = vmatpush1.msra.mxu0 0.0
        %857 = vmatprep.subr.mxu0 0.0
        %858 = vmatpush1.msra.mxu0 0.0
        %859 = vmatprep.subr.mxu0 0.0
        %860 = vmatpush1.msra.mxu0 0.0
        %861 = vmatprep.subr.mxu0 0.0
        %862 = vmatpush1.msra.mxu0 0.0
        %863 = vmatprep.subr.mxu0 0.0
        %864 = vmatpush1.msra.mxu0 0.0
        %865 = vmatprep.subr.mxu0 0.0
        %866 = vmatpush1.msra.mxu0 0.0
        %867 = vmatprep.subr.mxu0 0.0
        %868 = vmatpush1.msra.mxu0 0.0
        %869 = vmatprep.subr.mxu0 0.0
        %870 = vmatpush1.msra.mxu0 0.0
        %871 = vmatprep.subr.mxu0 0.0
        %872 = vmatpush1.msra.mxu0 0.0
        %873 = vmatprep.subr.mxu0 0.0
        %874 = vmatpush1.msra.mxu0 0.0
        %875 = vmatprep.subr.mxu0 0.0
        %876 = vmatpush1.msra.mxu0 0.0
        %877 = vmatprep.subr.mxu0 0.0
        %878 = vmatpush1.msra.mxu0 0.0
        %879 = vmatprep.subr.mxu0 0.0
        %880 = vmatpush1.msra.mxu0 0.0
        %881 = vmatprep.subr.mxu0 0.0
        %882 = vmatpush1.msra.mxu0 0.0
        %883 = vmatprep.subr.mxu0 0.0
        %884 = vmatpush1.msra.mxu0 0.0
        %885 = vmatprep.subr.mxu0 0.0
        %886 = vmatpush1.msra.mxu0 0.0
        %887 = vmatprep.mubr.f32.mxu0 0.0
        %888 = vmatmul.mubr.f32.gmra.mrb[0].mxu0 %v821
        %v889 = vpop.f32.mrb[0].mxu0
        %v890 = vadd.f32 %v817, %v889
        %v891 = vpop.f32.mrb[0].mxu0
        %892 = vdwg.mxu0
        %893 = vrot.lane.b32.xlu0 %v411, 112
        %v894 = vpop.permute.xlu0 %893
        %895 = vrot.lane.b32.xlu0 %v411, 80
        %v896 = vpop.permute.xlu0 %895
        %v897 = vsel %vm417, %v894, 0
        %v899 = vsel %vm417, %v896, 0
        %901 = vmatprep.subr.mxu0 0.0
        %902 = vmatpush1.xpose.msra.mxu0 %v899
        %903 = vmatprep.subr.mxu0 0.0
        %904 = vmatpush1.xpose.msra.mxu0 0.0
        %905 = vmatprep.subr.mxu0 0.0
        %906 = vmatpush1.xpose.msra.mxu0 0.0
        %907 = vmatprep.subr.mxu0 0.0
        %908 = vmatpush1.xpose.msra.mxu0 0.0
        %909 = vmatprep.subr.mxu0 0.0
        %910 = vmatpush1.xpose.msra.mxu0 0.0
        %911 = vmatprep.subr.mxu0 0.0
        %912 = vmatpush1.xpose.msra.mxu0 0.0
        %913 = vmatprep.subr.mxu0 0.0
        %914 = vmatpush1.xpose.msra.mxu0 0.0
        %915 = vmatprep.subr.mxu0 0.0
        %916 = vmatpush1.xpose.msra.mxu0 0.0
        %917 = vmatprep.subr.mxu0 0.0
        %918 = vmatpush1.xpose.msra.mxu0 0.0
        %919 = vmatprep.subr.mxu0 0.0
        %920 = vmatpush1.xpose.msra.mxu0 0.0
        %921 = vmatprep.subr.mxu0 0.0
        %922 = vmatpush1.xpose.msra.mxu0 0.0
        %923 = vmatprep.subr.mxu0 0.0
        %924 = vmatpush1.xpose.msra.mxu0 0.0
        %925 = vmatprep.subr.mxu0 0.0
        %926 = vmatpush1.xpose.msra.mxu0 0.0
        %927 = vmatprep.subr.mxu0 0.0
        %928 = vmatpush1.xpose.msra.mxu0 0.0
        %929 = vmatprep.subr.mxu0 0.0
        %930 = vmatpush1.xpose.msra.mxu0 0.0
        %931 = vmatprep.subr.mxu0 0.0
        %932 = vmatpush1.xpose.msra.mxu0 0.0
        %933 = vmatprep.subr.mxu0 0.0
        %934 = vmatpush1.xpose.msra.mxu0 0.0
        %935 = vmatprep.subr.mxu0 0.0
        %936 = vmatpush1.xpose.msra.mxu0 0.0
        %937 = vmatprep.subr.mxu0 0.0
        %938 = vmatpush1.xpose.msra.mxu0 0.0
        %939 = vmatprep.subr.mxu0 0.0
        %940 = vmatpush1.xpose.msra.mxu0 0.0
        %941 = vmatprep.subr.mxu0 0.0
        %942 = vmatpush1.xpose.msra.mxu0 0.0
        %943 = vmatprep.subr.mxu0 0.0
        %944 = vmatpush1.xpose.msra.mxu0 0.0
        %945 = vmatprep.subr.mxu0 0.0
        %946 = vmatpush1.xpose.msra.mxu0 0.0
        %947 = vmatprep.subr.mxu0 0.0
        %948 = vmatpush1.xpose.msra.mxu0 0.0
        %949 = vmatprep.subr.mxu0 0.0
        %950 = vmatpush1.xpose.msra.mxu0 0.0
        %951 = vmatprep.subr.mxu0 0.0
        %952 = vmatpush1.xpose.msra.mxu0 0.0
        %953 = vmatprep.subr.mxu0 0.0
        %954 = vmatpush1.xpose.msra.mxu0 0.0
        %955 = vmatprep.subr.mxu0 0.0
        %956 = vmatpush1.xpose.msra.mxu0 0.0
        %957 = vmatprep.subr.mxu0 0.0
        %958 = vmatpush1.xpose.msra.mxu0 0.0
        %959 = vmatprep.subr.mxu0 0.0
        %960 = vmatpush1.xpose.msra.mxu0 0.0
        %961 = vmatprep.subr.mxu0 0.0
        %962 = vmatpush1.xpose.msra.mxu0 0.0
        %963 = vmatprep.subr.mxu0 0.0
        %964 = vmatpush1.xpose.msra.mxu0 0.0
        %965 = vmatprep.mubr.f32.mxu0 0.0
        %966 = vmatmul.mubr.f32.gmra.mrb[0].mxu0 %v897
        %v967 = vpop.f32.mrb[0].mxu0
        %v968 = vadd.f32 0.0, %v967
        %v969 = vpop.f32.mrb[0].mxu0
        %970 = vdwg.mxu0
        %v971 = vsel %vm417, %v968, -inf
        %972 = vmax.xlane.f32.xlu0 %v971
        %v973 = vpop.xlane.xlu0 %972
        %v974 = vsub.f32 %v968, %v973
        %v975 = vmul.f32 %v974, 1.442695
        %v976 = vpow.pop %v975
        %v977 = vsel %vm417, %v976, 0.0
        %978 = vadd.xlane.f32.xlu0 %v977
        %v979 = vpop.xlane.xlu0 %978
        %v980 = vrcp.pop %v979
        %v981 = vmul.f32 %v976, %v980
        %982 = vrot.lane.b32.xlu0 %v411, 48
        %v983 = vpop.permute.xlu0 %982
        %v986 = vsel %vm417, %v981, 0
        %988 = vmatprep.subr.mxu0 0.0
        %989 = vmatpush1.msra.mxu0 %v983
        %990 = vmatprep.subr.mxu0 0.0
        %991 = vmatpush1.msra.mxu0 0.0
        %992 = vmatprep.subr.mxu0 0.0
        %993 = vmatpush1.msra.mxu0 0.0
        %994 = vmatprep.subr.mxu0 0.0
        %995 = vmatpush1.msra.mxu0 0.0
        %996 = vmatprep.subr.mxu0 0.0
        %997 = vmatpush1.msra.mxu0 0.0
        %998 = vmatprep.subr.mxu0 0.0
        %999 = vmatpush1.msra.mxu0 0.0
        %1000 = vmatprep.subr.mxu0 0.0
        %1001 = vmatpush1.msra.mxu0 0.0
        %1002 = vmatprep.subr.mxu0 0.0
        %1003 = vmatpush1.msra.mxu0 0.0
        %1004 = vmatprep.subr.mxu0 0.0
        %1005 = vmatpush1.msra.mxu0 0.0
        %1006 = vmatprep.subr.mxu0 0.0
        %1007 = vmatpush1.msra.mxu0 0.0
        %1008 = vmatprep.subr.mxu0 0.0
        %1009 = vmatpush1.msra.mxu0 0.0
        %1010 = vmatprep.subr.mxu0 0.0
        %1011 = vmatpush1.msra.mxu0 0.0
        %1012 = vmatprep.subr.mxu0 0.0
        %1013 = vmatpush1.msra.mxu0 0.0
        %1014 = vmatprep.subr.mxu0 0.0
        %1015 = vmatpush1.msra.mxu0 0.0
        %1016 = vmatprep.subr.mxu0 0.0
        %1017 = vmatpush1.msra.mxu0 0.0
        %1018 = vmatprep.subr.mxu0 0.0
        %1019 = vmatpush1.msra.mxu0 0.0
        %1020 = vmatprep.subr.mxu0 0.0
        %1021 = vmatpush1.msra.mxu0 0.0
        %1022 = vmatprep.subr.mxu0 0.0
        %1023 = vmatpush1.msra.mxu0 0.0
        %1024 = vmatprep.subr.mxu0 0.0
        %1025 = vmatpush1.msra.mxu0 0.0
        %1026 = vmatprep.subr.mxu0 0.0
        %1027 = vmatpush1.msra.mxu0 0.0
        %1028 = vmatprep.subr.mxu0 0.0
        %1029 = vmatpush1.msra.mxu0 0.0
        %1030 = vmatprep.subr.mxu0 0.0
        %1031 = vmatpush1.msra.mxu0 0.0
        %1032 = vmatprep.subr.mxu0 0.0
        %1033 = vmatpush1.msra.mxu0 0.0
        %1034 = vmatprep.subr.mxu0 0.0
        %1035 = vmatpush1.msra.mxu0 0.0
        %1036 = vmatprep.subr.mxu0 0.0
        %1037 = vmatpush1.msra.mxu0 0.0
        %1038 = vmatprep.subr.mxu0 0.0
        %1039 = vmatpush1.msra.mxu0 0.0
        %1040 = vmatprep.subr.mxu0 0.0
        %1041 = vmatpush1.msra.mxu0 0.0
        %1042 = vmatprep.subr.mxu0 0.0
        %1043 = vmatpush1.msra.mxu0 0.0
        %1044 = vmatprep.subr.mxu0 0.0
        %1045 = vmatpush1.msra.mxu0 0.0
        %1046 = vmatprep.subr.mxu0 0.0
        %1047 = vmatpush1.msra.mxu0 0.0
        %1048 = vmatprep.subr.mxu0 0.0
        %1049 = vmatpush1.msra.mxu0 0.0
        %1050 = vmatprep.subr.mxu0 0.0
        %1051 = vmatpush1.msra.mxu0 0.0
        %1052 = vmatprep.mubr.f32.mxu0 0.0
        %1053 = vmatmul.mubr.f32.gmra.mrb[0].mxu0 %v986
        %v1054 = vpop.f32.mrb[0].mxu0
        %v1055 = vadd.f32 0.0, %v1054
        %v1056 = vpop.f32.mrb[0].mxu0
        %1057 = vdwg.mxu0
        %s1058 = scalar_lea.vmem %s3, 16
        %v1059 = vld [vmem:[%s1058] sm:$0xff]
        %v1061 = vsel %vm417, %v1055, 0
        %1063 = vmatprep.subr.mxu0 0.0
        %1064 = vmatpush1.msra.mxu0 %v1059
        %1065 = vmatprep.subr.mxu0 0.0
        %1066 = vmatpush1.msra.mxu0 0.0
        %1067 = vmatprep.subr.mxu0 0.0
        %1068 = vmatpush1.msra.mxu0 0.0
        %1069 = vmatprep.subr.mxu0 0.0
        %1070 = vmatpush1.msra.mxu0 0.0
        %1071 = vmatprep.subr.mxu0 0.0
        %1072 = vmatpush1.msra.mxu0 0.0
        %1073 = vmatprep.subr.mxu0 0.0
        %1074 = vmatpush1.msra.mxu0 0.0
        %1075 = vmatprep.subr.mxu0 0.0
        %1076 = vmatpush1.msra.mxu0 0.0
        %1077 = vmatprep.subr.mxu0 0.0
        %1078 = vmatpush1.msra.mxu0 0.0
        %1079 = vmatprep.subr.mxu0 0.0
        %1080 = vmatpush1.msra.mxu0 0.0
        %1081 = vmatprep.subr.mxu0 0.0
        %1082 = vmatpush1.msra.mxu0 0.0
        %1083 = vmatprep.subr.mxu0 0.0
        %1084 = vmatpush1.msra.mxu0 0.0
        %1085 = vmatprep.subr.mxu0 0.0
        %1086 = vmatpush1.msra.mxu0 0.0
        %1087 = vmatprep.subr.mxu0 0.0
        %1088 = vmatpush1.msra.mxu0 0.0
        %1089 = vmatprep.subr.mxu0 0.0
        %1090 = vmatpush1.msra.mxu0 0.0
        %1091 = vmatprep.subr.mxu0 0.0
        %1092 = vmatpush1.msra.mxu0 0.0
        %1093 = vmatprep.subr.mxu0 0.0
        %1094 = vmatpush1.msra.mxu0 0.0
        %1095 = vmatprep.subr.mxu0 0.0
        %1096 = vmatpush1.msra.mxu0 0.0
        %1097 = vmatprep.subr.mxu0 0.0
        %1098 = vmatpush1.msra.mxu0 0.0
        %1099 = vmatprep.subr.mxu0 0.0
        %1100 = vmatpush1.msra.mxu0 0.0
        %1101 = vmatprep.subr.mxu0 0.0
        %1102 = vmatpush1.msra.mxu0 0.0
        %1103 = vmatprep.subr.mxu0 0.0
        %1104 = vmatpush1.msra.mxu0 0.0
        %1105 = vmatprep.subr.mxu0 0.0
        %1106 = vmatpush1.msra.mxu0 0.0
        %1107 = vmatprep.subr.mxu0 0.0
        %1108 = vmatpush1.msra.mxu0 0.0
        %1109 = vmatprep.subr.mxu0 0.0
        %1110 = vmatpush1.msra.mxu0 0.0
        %1111 = vmatprep.subr.mxu0 0.0
        %1112 = vmatpush1.msra.mxu0 0.0
        %1113 = vmatprep.subr.mxu0 0.0
        %1114 = vmatpush1.msra.mxu0 0.0
        %1115 = vmatprep.subr.mxu0 0.0
        %1116 = vmatpush1.msra.mxu0 0.0
        %1117 = vmatprep.subr.mxu0 0.0
        %1118 = vmatpush1.msra.mxu0 0.0
        %1119 = vmatprep.subr.mxu0 0.0
        %1120 = vmatpush1.msra.mxu0 0.0
        %1121 = vmatprep.subr.mxu0 0.0
        %1122 = vmatpush1.msra.mxu0 0.0
        %1123 = vmatprep.subr.mxu0 0.0
        %1124 = vmatpush1.msra.mxu0 0.0
        %1125 = vmatprep.subr.mxu0 0.0
        %1126 = vmatpush1.msra.mxu0 0.0
        %1127 = vmatprep.mubr.f32.mxu0 0.0
        %1128 = vmatmul.mubr.f32.gmra.mrb[0].mxu0 %v1061
        %v1129 = vpop.f32.mrb[0].mxu0
        %v1130 = vadd.f32 0.0, %v1129
        %v1131 = vpop.f32.mrb[0].mxu0
        %1132 = vdwg.mxu0
        %v1133 = vadd.f32 %v890, %v1130
        %1134 = vrot.lane.b32.xlu0 %v411, 104
        %v1135 = vpop.permute.xlu0 %1134
        %1136 = vrot.lane.b32.xlu0 %v411, 72
        %v1137 = vpop.permute.xlu0 %1136
        %v1138 = vsel %vm417, %v1135, 0
        %v1140 = vsel %vm417, %v1137, 0
        %1142 = vmatprep.subr.mxu0 0.0
        %1143 = vmatpush1.xpose.msra.mxu0 %v1140
        %1144 = vmatprep.subr.mxu0 0.0
        %1145 = vmatpush1.xpose.msra.mxu0 0.0
        %1146 = vmatprep.subr.mxu0 0.0
        %1147 = vmatpush1.xpose.msra.mxu0 0.0
        %1148 = vmatprep.subr.mxu0 0.0
        %1149 = vmatpush1.xpose.msra.mxu0 0.0
        %1150 = vmatprep.subr.mxu0 0.0
        %1151 = vmatpush1.xpose.msra.mxu0 0.0
        %1152 = vmatprep.subr.mxu0 0.0
        %1153 = vmatpush1.xpose.msra.mxu0 0.0
        %1154 = vmatprep.subr.mxu0 0.0
        %1155 = vmatpush1.xpose.msra.mxu0 0.0
        %1156 = vmatprep.subr.mxu0 0.0
        %1157 = vmatpush1.xpose.msra.mxu0 0.0
        %1158 = vmatprep.subr.mxu0 0.0
        %1159 = vmatpush1.xpose.msra.mxu0 0.0
        %1160 = vmatprep.subr.mxu0 0.0
        %1161 = vmatpush1.xpose.msra.mxu0 0.0
        %1162 = vmatprep.subr.mxu0 0.0
        %1163 = vmatpush1.xpose.msra.mxu0 0.0
        %1164 = vmatprep.subr.mxu0 0.0
        %1165 = vmatpush1.xpose.msra.mxu0 0.0
        %1166 = vmatprep.subr.mxu0 0.0
        %1167 = vmatpush1.xpose.msra.mxu0 0.0
        %1168 = vmatprep.subr.mxu0 0.0
        %1169 = vmatpush1.xpose.msra.mxu0 0.0
        %1170 = vmatprep.subr.mxu0 0.0
        %1171 = vmatpush1.xpose.msra.mxu0 0.0
        %1172 = vmatprep.subr.mxu0 0.0
        %1173 = vmatpush1.xpose.msra.mxu0 0.0
        %1174 = vmatprep.subr.mxu0 0.0
        %1175 = vmatpush1.xpose.msra.mxu0 0.0
        %1176 = vmatprep.subr.mxu0 0.0
        %1177 = vmatpush1.xpose.msra.mxu0 0.0
        %1178 = vmatprep.subr.mxu0 0.0
        %1179 = vmatpush1.xpose.msra.mxu0 0.0
        %1180 = vmatprep.subr.mxu0 0.0
        %1181 = vmatpush1.xpose.msra.mxu0 0.0
        %1182 = vmatprep.subr.mxu0 0.0
        %1183 = vmatpush1.xpose.msra.mxu0 0.0
        %1184 = vmatprep.subr.mxu0 0.0
        %1185 = vmatpush1.xpose.msra.mxu0 0.0
        %1186 = vmatprep.subr.mxu0 0.0
        %1187 = vmatpush1.xpose.msra.mxu0 0.0
        %1188 = vmatprep.subr.mxu0 0.0
        %1189 = vmatpush1.xpose.msra.mxu0 0.0
        %1190 = vmatprep.subr.mxu0 0.0
        %1191 = vmatpush1.xpose.msra.mxu0 0.0
        %1192 = vmatprep.subr.mxu0 0.0
        %1193 = vmatpush1.xpose.msra.mxu0 0.0
        %1194 = vmatprep.subr.mxu0 0.0
        %1195 = vmatpush1.xpose.msra.mxu0 0.0
        %1196 = vmatprep.subr.mxu0 0.0
        %1197 = vmatpush1.xpose.msra.mxu0 0.0
        %1198 = vmatprep.subr.mxu0 0.0
        %1199 = vmatpush1.xpose.msra.mxu0 0.0
        %1200 = vmatprep.subr.mxu0 0.0
        %1201 = vmatpush1.xpose.msra.mxu0 0.0
        %1202 = vmatprep.subr.mxu0 0.0
        %1203 = vmatpush1.xpose.msra.mxu0 0.0
        %1204 = vmatprep.subr.mxu0 0.0
        %1205 = vmatpush1.xpose.msra.mxu0 0.0
        %1206 = vmatprep.mubr.f32.mxu0 0.0
        %1207 = vmatmul.mubr.f32.gmra.mrb[0].mxu0 %v1138
        %v1208 = vpop.f32.mrb[0].mxu0
        %v1209 = vadd.f32 0.0, %v1208
        %v1210 = vpop.f32.mrb[0].mxu0
        %1211 = vdwg.mxu0
        %v1212 = vsel %vm417, %v1209, -inf
        %1213 = vmax.xlane.f32.xlu0 %v1212
        %v1214 = vpop.xlane.xlu0 %1213
        %v1215 = vsub.f32 %v1209, %v1214
        %v1216 = vmul.f32 %v1215, 1.442695
        %v1217 = vpow.pop %v1216
        %v1218 = vsel %vm417, %v1217, 0.0
        %1219 = vadd.xlane.f32.xlu0 %v1218
        %v1220 = vpop.xlane.xlu0 %1219
        %v1221 = vrcp.pop %v1220
        %v1222 = vmul.f32 %v1217, %v1221
        %1223 = vrot.lane.b32.xlu0 %v411, 40
        %v1224 = vpop.permute.xlu0 %1223
        %v1227 = vsel %vm417, %v1222, 0
        %1229 = vmatprep.subr.mxu0 0.0
        %1230 = vmatpush1.msra.mxu0 %v1224
        %1231 = vmatprep.subr.mxu0 0.0
        %1232 = vmatpush1.msra.mxu0 0.0
        %1233 = vmatprep.subr.mxu0 0.0
        %1234 = vmatpush1.msra.mxu0 0.0
        %1235 = vmatprep.subr.mxu0 0.0
        %1236 = vmatpush1.msra.mxu0 0.0
        %1237 = vmatprep.subr.mxu0 0.0
        %1238 = vmatpush1.msra.mxu0 0.0
        %1239 = vmatprep.subr.mxu0 0.0
        %1240 = vmatpush1.msra.mxu0 0.0
        %1241 = vmatprep.subr.mxu0 0.0
        %1242 = vmatpush1.msra.mxu0 0.0
        %1243 = vmatprep.subr.mxu0 0.0
        %1244 = vmatpush1.msra.mxu0 0.0
        %1245 = vmatprep.subr.mxu0 0.0
        %1246 = vmatpush1.msra.mxu0 0.0
        %1247 = vmatprep.subr.mxu0 0.0
        %1248 = vmatpush1.msra.mxu0 0.0
        %1249 = vmatprep.subr.mxu0 0.0
        %1250 = vmatpush1.msra.mxu0 0.0
        %1251 = vmatprep.subr.mxu0 0.0
        %1252 = vmatpush1.msra.mxu0 0.0
        %1253 = vmatprep.subr.mxu0 0.0
        %1254 = vmatpush1.msra.mxu0 0.0
        %1255 = vmatprep.subr.mxu0 0.0
        %1256 = vmatpush1.msra.mxu0 0.0
        %1257 = vmatprep.subr.mxu0 0.0
        %1258 = vmatpush1.msra.mxu0 0.0
        %1259 = vmatprep.subr.mxu0 0.0
        %1260 = vmatpush1.msra.mxu0 0.0
        %1261 = vmatprep.subr.mxu0 0.0
        %1262 = vmatpush1.msra.mxu0 0.0
        %1263 = vmatprep.subr.mxu0 0.0
        %1264 = vmatpush1.msra.mxu0 0.0
        %1265 = vmatprep.subr.mxu0 0.0
        %1266 = vmatpush1.msra.mxu0 0.0
        %1267 = vmatprep.subr.mxu0 0.0
        %1268 = vmatpush1.msra.mxu0 0.0
        %1269 = vmatprep.subr.mxu0 0.0
        %1270 = vmatpush1.msra.mxu0 0.0
        %1271 = vmatprep.subr.mxu0 0.0
        %1272 = vmatpush1.msra.mxu0 0.0
        %1273 = vmatprep.subr.mxu0 0.0
        %1274 = vmatpush1.msra.mxu0 0.0
        %1275 = vmatprep.subr.mxu0 0.0
        %1276 = vmatpush1.msra.mxu0 0.0
        %1277 = vmatprep.subr.mxu0 0.0
        %1278 = vmatpush1.msra.mxu0 0.0
        %1279 = vmatprep.subr.mxu0 0.0
        %1280 = vmatpush1.msra.mxu0 0.0
        %1281 = vmatprep.subr.mxu0 0.0
        %1282 = vmatpush1.msra.mxu0 0.0
        %1283 = vmatprep.subr.mxu0 0.0
        %1284 = vmatpush1.msra.mxu0 0.0
        %1285 = vmatprep.subr.mxu0 0.0
        %1286 = vmatpush1.msra.mxu0 0.0
        %1287 = vmatprep.subr.mxu0 0.0
        %1288 = vmatpush1.msra.mxu0 0.0
        %1289 = vmatprep.subr.mxu0 0.0
        %1290 = vmatpush1.msra.mxu0 0.0
        %1291 = vmatprep.subr.mxu0 0.0
        %1292 = vmatpush1.msra.mxu0 0.0
        %1293 = vmatprep.mubr.f32.mxu0 0.0
        %1294 = vmatmul.mubr.f32.gmra.mrb[0].mxu0 %v1227
        %v1295 = vpop.f32.mrb[0].mxu0
        %v1296 = vadd.f32 0.0, %v1295
        %v1297 = vpop.f32.mrb[0].mxu0
        %1298 = vdwg.mxu0
        %s1299 = scalar_lea.vmem %s3, 24
        %v1300 = vld [vmem:[%s1299] sm:$0xff]
        %v1302 = vsel %vm417, %v1296, 0
        %1304 = vmatprep.subr.mxu0 0.0
        %1305 = vmatpush1.msra.mxu0 %v1300
        %1306 = vmatprep.subr.mxu0 0.0
        %1307 = vmatpush1.msra.mxu0 0.0
        %1308 = vmatprep.subr.mxu0 0.0
        %1309 = vmatpush1.msra.mxu0 0.0
        %1310 = vmatprep.subr.mxu0 0.0
        %1311 = vmatpush1.msra.mxu0 0.0
        %1312 = vmatprep.subr.mxu0 0.0
        %1313 = vmatpush1.msra.mxu0 0.0
        %1314 = vmatprep.subr.mxu0 0.0
        %1315 = vmatpush1.msra.mxu0 0.0
        %1316 = vmatprep.subr.mxu0 0.0
        %1317 = vmatpush1.msra.mxu0 0.0
        %1318 = vmatprep.subr.mxu0 0.0
        %1319 = vmatpush1.msra.mxu0 0.0
        %1320 = vmatprep.subr.mxu0 0.0
        %1321 = vmatpush1.msra.mxu0 0.0
        %1322 = vmatprep.subr.mxu0 0.0
        %1323 = vmatpush1.msra.mxu0 0.0
        %1324 = vmatprep.subr.mxu0 0.0
        %1325 = vmatpush1.msra.mxu0 0.0
        %1326 = vmatprep.subr.mxu0 0.0
        %1327 = vmatpush1.msra.mxu0 0.0
        %1328 = vmatprep.subr.mxu0 0.0
        %1329 = vmatpush1.msra.mxu0 0.0
        %1330 = vmatprep.subr.mxu0 0.0
        %1331 = vmatpush1.msra.mxu0 0.0
        %1332 = vmatprep.subr.mxu0 0.0
        %1333 = vmatpush1.msra.mxu0 0.0
        %1334 = vmatprep.subr.mxu0 0.0
        %1335 = vmatpush1.msra.mxu0 0.0
        %1336 = vmatprep.subr.mxu0 0.0
        %1337 = vmatpush1.msra.mxu0 0.0
        %1338 = vmatprep.subr.mxu0 0.0
        %1339 = vmatpush1.msra.mxu0 0.0
        %1340 = vmatprep.subr.mxu0 0.0
        %1341 = vmatpush1.msra.mxu0 0.0
        %1342 = vmatprep.subr.mxu0 0.0
        %1343 = vmatpush1.msra.mxu0 0.0
        %1344 = vmatprep.subr.mxu0 0.0
        %1345 = vmatpush1.msra.mxu0 0.0
        %1346 = vmatprep.subr.mxu0 0.0
        %1347 = vmatpush1.msra.mxu0 0.0
        %1348 = vmatprep.subr.mxu0 0.0
        %1349 = vmatpush1.msra.mxu0 0.0
        %1350 = vmatprep.subr.mxu0 0.0
        %1351 = vmatpush1.msra.mxu0 0.0
        %1352 = vmatprep.subr.mxu0 0.0
        %1353 = vmatpush1.msra.mxu0 0.0
        %1354 = vmatprep.subr.mxu0 0.0
        %1355 = vmatpush1.msra.mxu0 0.0
        %1356 = vmatprep.subr.mxu0 0.0
        %1357 = vmatpush1.msra.mxu0 0.0
        %1358 = vmatprep.subr.mxu0 0.0
        %1359 = vmatpush1.msra.mxu0 0.0
        %1360 = vmatprep.subr.mxu0 0.0
        %1361 = vmatpush1.msra.mxu0 0.0
        %1362 = vmatprep.subr.mxu0 0.0
        %1363 = vmatpush1.msra.mxu0 0.0
        %1364 = vmatprep.subr.mxu0 0.0
        %1365 = vmatpush1.msra.mxu0 0.0
        %1366 = vmatprep.subr.mxu0 0.0
        %1367 = vmatpush1.msra.mxu0 0.0
        %1368 = vmatprep.mubr.f32.mxu0 0.0
        %1369 = vmatmul.mubr.f32.gmra.mrb[0].mxu0 %v1302
        %v1370 = vpop.f32.mrb[0].mxu0
        %v1371 = vadd.f32 0.0, %v1370
        %v1372 = vpop.f32.mrb[0].mxu0
        %1373 = vdwg.mxu0
        %v1374 = vadd.f32 %v1133, %v1371
        %v1375 = vld [vmem:[%s4] sm:$0x1]
        %v1377 = vlaneseq
        %v1378 = vshrl.u32 %v1377, 7
        %v1379 = vsub.s32 0, %v1378
        %v1380 = vrot.slane %v1375, %v1379
        %v1382 = vadd.f32 %v1374, %v1380
        %v1383 = vadd.f32 %v1382, %v328
        %v1384 = vsel %vm340, %v1383, 0.0
        %1385 = vadd.xlane.f32.xlu0 %v1384
        %v1386 = vpop.xlane.xlu0 %1385
        %v1387 = vrot.slane %v1386, 4
        %v1388 = vadd.f32 %v1386, %v1387
        %v1389 = vrot.slane %v1388, 2
        %v1390 = vadd.f32 %v1388, %v1389
        %v1391 = vrot.slane %v1390, 1
        %v1392 = vadd.f32 %v1390, %v1391
        %s1393 = vtos %v1392
        %v1394 = vmul.f32 %v1383, %v1383
        %v1395 = vsel %vm340, %v1394, 0.0
        %1396 = vadd.xlane.f32.xlu0 %v1395
        %v1397 = vpop.xlane.xlu0 %1396
        %v1398 = vrot.slane %v1397, 4
        %v1399 = vadd.f32 %v1397, %v1398
        %v1400 = vrot.slane %v1399, 2
        %v1401 = vadd.f32 %v1399, %v1400
        %v1402 = vrot.slane %v1401, 1
        %v1403 = vadd.f32 %v1401, %v1402
        %s1404 = vtos %v1403
        %s1405 = smul.f32 %s1393, 0.00390625
        %s1406 = smul.f32 %s1404, 0.00390625
        %s1407 = smul.f32 %s1405, %s1405
        %s1408 = ssub.f32 %s1406, %s1407
        %v1409 = vstv %s1405
        %v1410 = vsub.f32 %v1383, %v1409
        %s1411 = sadd.f32 %s1408, 1e-05
        %v1412 = vstv %s1411
        %v1413 = vrsqrt.pop %v1412
        %s1414 = vtos %v1413
        %v1415 = vstv %s1414
        %v1416 = vmul.f32 %v1410, %v1415
        %v1417 = vld [vmem:[%s5] sm:$0xff]
        %v1418 = vld [vmem:[%s5 + $0x8] sm:$0xff]
        %v1419 = vld [vmem:[%s5 + $0x10] sm:$0xff]
        %v1420 = vld [vmem:[%s5 + $0x18] sm:$0xff]
        %v1421 = vld [vmem:[%s6] sm:$0x1]
        %v1423 = vlaneseq
        %v1424 = vshrl.u32 %v1423, 7
        %v1425 = vsub.s32 0, %v1424
        %v1426 = vrot.slane %v1421, %v1425
        %v1429 = vsel %vm340, %v1416, 0
        %1431 = vmatprep.subr.mxu0 0.0
        %1432 = vmatpush1.msra.mxu0 %v1417
        %1433 = vmatprep.subr.mxu0 0.0
        %1434 = vmatpush1.msra.mxu0 %v1418
        %1435 = vmatprep.subr.mxu0 0.0
        %1436 = vmatpush1.msra.mxu0 %v1419
        %1437 = vmatprep.subr.mxu0 0.0
        %1438 = vmatpush1.msra.mxu0 %v1420
        %1439 = vmatprep.subr.mxu0 0.0
        %1440 = vmatpush1.msra.mxu0 0.0
        %1441 = vmatprep.subr.mxu0 0.0
        %1442 = vmatpush1.msra.mxu0 0.0
        %1443 = vmatprep.subr.mxu0 0.0
        %1444 = vmatpush1.msra.mxu0 0.0
        %1445 = vmatprep.subr.mxu0 0.0
        %1446 = vmatpush1.msra.mxu0 0.0
        %1447 = vmatprep.subr.mxu0 0.0
        %1448 = vmatpush1.msra.mxu0 0.0
        %1449 = vmatprep.subr.mxu0 0.0
        %1450 = vmatpush1.msra.mxu0 0.0
        %1451 = vmatprep.subr.mxu0 0.0
        %1452 = vmatpush1.msra.mxu0 0.0
        %1453 = vmatprep.subr.mxu0 0.0
        %1454 = vmatpush1.msra.mxu0 0.0
        %1455 = vmatprep.subr.mxu0 0.0
        %1456 = vmatpush1.msra.mxu0 0.0
        %1457 = vmatprep.subr.mxu0 0.0
        %1458 = vmatpush1.msra.mxu0 0.0
        %1459 = vmatprep.subr.mxu0 0.0
        %1460 = vmatpush1.msra.mxu0 0.0
        %1461 = vmatprep.subr.mxu0 0.0
        %1462 = vmatpush1.msra.mxu0 0.0
        %1463 = vmatprep.subr.mxu0 0.0
        %1464 = vmatpush1.msra.mxu0 0.0
        %1465 = vmatprep.subr.mxu0 0.0
        %1466 = vmatpush1.msra.mxu0 0.0
        %1467 = vmatprep.subr.mxu0 0.0
        %1468 = vmatpush1.msra.mxu0 0.0
        %1469 = vmatprep.subr.mxu0 0.0
        %1470 = vmatpush1.msra.mxu0 0.0
        %1471 = vmatprep.subr.mxu0 0.0
        %1472 = vmatpush1.msra.mxu0 0.0
        %1473 = vmatprep.subr.mxu0 0.0
        %1474 = vmatpush1.msra.mxu0 0.0
        %1475 = vmatprep.subr.mxu0 0.0
        %1476 = vmatpush1.msra.mxu0 0.0
        %1477 = vmatprep.subr.mxu0 0.0
        %1478 = vmatpush1.msra.mxu0 0.0
        %1479 = vmatprep.subr.mxu0 0.0
        %1480 = vmatpush1.msra.mxu0 0.0
        %1481 = vmatprep.subr.mxu0 0.0
        %1482 = vmatpush1.msra.mxu0 0.0
        %1483 = vmatprep.subr.mxu0 0.0
        %1484 = vmatpush1.msra.mxu0 0.0
        %1485 = vmatprep.subr.mxu0 0.0
        %1486 = vmatpush1.msra.mxu0 0.0
        %1487 = vmatprep.subr.mxu0 0.0
        %1488 = vmatpush1.msra.mxu0 0.0
        %1489 = vmatprep.subr.mxu0 0.0
        %1490 = vmatpush1.msra.mxu0 0.0
        %1491 = vmatprep.subr.mxu0 0.0
        %1492 = vmatpush1.msra.mxu0 0.0
        %1493 = vmatprep.subr.mxu0 0.0
        %1494 = vmatpush1.msra.mxu0 0.0
        %1495 = vmatprep.mubr.f32.mxu0 0.0
        %1496 = vmatmul.mubr.f32.gmra.mrb[0].mxu0 %v1429
        %v1497 = vpop.f32.mrb[0].mxu0
        %v1498 = vadd.f32 %v1426, %v1497
        %v1499 = vpop.f32.mrb[0].mxu0
        %1500 = vdwg.mxu0
        %v1501 = vmax.f32 %v1498, 0.0
        %v1502 = vld [vmem:[%s7] sm:$0xff]
        %v1503 = vld [vmem:[%s7 + $0x8] sm:$0xff]
        %v1504 = vld [vmem:[%s7 + $0x10] sm:$0xff]
        %v1505 = vld [vmem:[%s7 + $0x18] sm:$0xff]
        %v1506 = vld [vmem:[%s7 + $0x20] sm:$0xff]
        %v1507 = vld [vmem:[%s7 + $0x28] sm:$0xff]
        %v1508 = vld [vmem:[%s7 + $0x30] sm:$0xff]
        %v1509 = vld [vmem:[%s7 + $0x38] sm:$0xff]
        %v1510 = vld [vmem:[%s7 + $0x40] sm:$0xff]
        %v1511 = vld [vmem:[%s7 + $0x48] sm:$0xff]
        %v1512 = vld [vmem:[%s7 + $0x50] sm:$0xff]
        %v1513 = vld [vmem:[%s7 + $0x58] sm:$0xff]
        %v1514 = vld [vmem:[%s7 + $0x60] sm:$0xff]
        %v1515 = vld [vmem:[%s7 + $0x68] sm:$0xff]
        %v1516 = vld [vmem:[%s7 + $0x70] sm:$0xff]
        %v1517 = vld [vmem:[%s7 + $0x78] sm:$0xff]
        %v1518 = vld [vmem:[%s8] sm:$0x1]
        %v1520 = vlaneseq
        %v1521 = vshrl.u32 %v1520, 7
        %v1522 = vsub.s32 0, %v1521
        %v1523 = vrot.slane %v1518, %v1522
        %1525 = vmatprep.subr.mxu0 0.0
        %1526 = vmatpush1.msra.mxu0 %v1502
        %1527 = vmatprep.subr.mxu0 0.0
        %1528 = vmatpush1.msra.mxu0 %v1503
        %1529 = vmatprep.subr.mxu0 0.0
        %1530 = vmatpush1.msra.mxu0 %v1504
        %1531 = vmatprep.subr.mxu0 0.0
        %1532 = vmatpush1.msra.mxu0 %v1505
        %1533 = vmatprep.subr.mxu0 0.0
        %1534 = vmatpush1.msra.mxu0 %v1506
        %1535 = vmatprep.subr.mxu0 0.0
        %1536 = vmatpush1.msra.mxu0 %v1507
        %1537 = vmatprep.subr.mxu0 0.0
        %1538 = vmatpush1.msra.mxu0 %v1508
        %1539 = vmatprep.subr.mxu0 0.0
        %1540 = vmatpush1.msra.mxu0 %v1509
        %1541 = vmatprep.subr.mxu0 0.0
        %1542 = vmatpush1.msra.mxu0 %v1510
        %1543 = vmatprep.subr.mxu0 0.0
        %1544 = vmatpush1.msra.mxu0 %v1511
        %1545 = vmatprep.subr.mxu0 0.0
        %1546 = vmatpush1.msra.mxu0 %v1512
        %1547 = vmatprep.subr.mxu0 0.0
        %1548 = vmatpush1.msra.mxu0 %v1513
        %1549 = vmatprep.subr.mxu0 0.0
        %1550 = vmatpush1.msra.mxu0 %v1514
        %1551 = vmatprep.subr.mxu0 0.0
        %1552 = vmatpush1.msra.mxu0 %v1515
        %1553 = vmatprep.subr.mxu0 0.0
        %1554 = vmatpush1.msra.mxu0 %v1516
        %1555 = vmatprep.subr.mxu0 0.0
        %1556 = vmatpush1.msra.mxu0 %v1517
        %1557 = vmatprep.subr.mxu0 0.0
        %1558 = vmatpush1.msra.mxu0 0.0
        %1559 = vmatprep.subr.mxu0 0.0
        %1560 = vmatpush1.msra.mxu0 0.0
        %1561 = vmatprep.subr.mxu0 0.0
        %1562 = vmatpush1.msra.mxu0 0.0
        %1563 = vmatprep.subr.mxu0 0.0
        %1564 = vmatpush1.msra.mxu0 0.0
        %1565 = vmatprep.subr.mxu0 0.0
        %1566 = vmatpush1.msra.mxu0 0.0
        %1567 = vmatprep.subr.mxu0 0.0
        %1568 = vmatpush1.msra.mxu0 0.0
        %1569 = vmatprep.subr.mxu0 0.0
        %1570 = vmatpush1.msra.mxu0 0.0
        %1571 = vmatprep.subr.mxu0 0.0
        %1572 = vmatpush1.msra.mxu0 0.0
        %1573 = vmatprep.subr.mxu0 0.0
        %1574 = vmatpush1.msra.mxu0 0.0
        %1575 = vmatprep.subr.mxu0 0.0
        %1576 = vmatpush1.msra.mxu0 0.0
        %1577 = vmatprep.subr.mxu0 0.0
        %1578 = vmatpush1.msra.mxu0 0.0
        %1579 = vmatprep.subr.mxu0 0.0
        %1580 = vmatpush1.msra.mxu0 0.0
        %1581 = vmatprep.subr.mxu0 0.0
        %1582 = vmatpush1.msra.mxu0 0.0
        %1583 = vmatprep.subr.mxu0 0.0
        %1584 = vmatpush1.msra.mxu0 0.0
        %1585 = vmatprep.subr.mxu0 0.0
        %1586 = vmatpush1.msra.mxu0 0.0
        %1587 = vmatprep.subr.mxu0 0.0
        %1588 = vmatpush1.msra.mxu0 0.0
        %1589 = vmatprep.mubr.f32.mxu0 0.0
        %1590 = vmatmul.mubr.f32.gmra.mrb[0].mxu0 %v1501
        %v1591 = vpop.f32.mrb[0].mxu0
        %v1592 = vadd.f32 %v1523, %v1591
        %v1593 = vpop.f32.mrb[0].mxu0
        %1594 = vdwg.mxu0
        %v1595 = vadd.f32 %v1592, %v1416
        %v1596 = vsel %vm340, %v1595, 0.0
        %1597 = vadd.xlane.f32.xlu0 %v1596
        %v1598 = vpop.xlane.xlu0 %1597
        %v1599 = vrot.slane %v1598, 4
        %v1600 = vadd.f32 %v1598, %v1599
        %v1601 = vrot.slane %v1600, 2
        %v1602 = vadd.f32 %v1600, %v1601
        %v1603 = vrot.slane %v1602, 1
        %v1604 = vadd.f32 %v1602, %v1603
        %s1605 = vtos %v1604
        %v1606 = vmul.f32 %v1595, %v1595
        %v1607 = vsel %vm340, %v1606, 0.0
        %1608 = vadd.xlane.f32.xlu0 %v1607
        %v1609 = vpop.xlane.xlu0 %1608
        %v1610 = vrot.slane %v1609, 4
        %v1611 = vadd.f32 %v1609, %v1610
        %v1612 = vrot.slane %v1611, 2
        %v1613 = vadd.f32 %v1611, %v1612
        %v1614 = vrot.slane %v1613, 1
        %v1615 = vadd.f32 %v1613, %v1614
        %s1616 = vtos %v1615
        %s1617 = smul.f32 %s1605, 0.00390625
        %s1618 = smul.f32 %s1616, 0.00390625
        %s1619 = smul.f32 %s1617, %s1617
        %s1620 = ssub.f32 %s1618, %s1619
        %v1621 = vstv %s1617
        %v1622 = vsub.f32 %v1595, %v1621
        %s1623 = sadd.f32 %s1620, 1e-05
        %v1624 = vstv %s1623
        %v1625 = vrsqrt.pop %v1624
        %s1626 = vtos %v1625
        %v1627 = vstv %s1626
        %v1628 = vmul.f32 %v1622, %v1627
        %1629 = vst.msk [vmem:[%s323] sm:$0xff] %vm340, %v1628
        %s1630 = sand.u32 %s225, 1
        %s1631 = scalar_lea.sflag [#allocation3], %s1630
        %s1632 = sand.u32 %s225, 1
        %s1633 = smul.addr %s1632, 8
        %s1634 = scalar_lea.vmem [#allocation2], %s1633
        // Predicated region
        $region57: #{tpu_custom_call.1} parent=55 // pred_check
          %p1635 = pneg %p235
        $region58: #{tpu_custom_call.1} parent=55 // pred_check_branch
          %1637 = sbr.rel (%p1635) target = $region60
        $region59: #{tpu_custom_call.1} parent=55 // pred_region
          %s1639 = ssub.s32 128, 128
          %1640 = vsyncadd %s1631, %s1639
          %s1641 = smul.addr %s23, 128
          %s1642 = scalar_lea.hbm %s9, %s1641
          %s1644 = sshll.u32 %s1634, 4
          %s1645 = int_to_ptr.vmem [resolvable:$true] %s1644
          %1647 = dma.vmem_to_hbm [thread:$0]  %s1645, 128, %s1642, %s1631
        $region60: #{tpu_custom_call.1} parent=55 // pred_fallthru
          _
      $region56: #{tpu_custom_call.1} parent=5 // pred_fallthru
        _
      %p1648 = scmp.le.s32.totalorder 2, %s18
      // Predicated region
      $region61: #{tpu_custom_call.1} parent=5 // pred_check
        %p1649 = pneg %p1648
      $region62: #{tpu_custom_call.1} parent=5 // pred_check_branch
        %1651 = sbr.rel (%p1649) target = $region64
      $region63: #{tpu_custom_call.1} parent=5 // pred_region
        %s1652 = ssub.s32 %s18, 2
        // Predicated region
        $region65: #{tpu_custom_call.1} parent=63 // pred_check
          %p1653 = pneg %p241
        $region66: #{tpu_custom_call.1} parent=63 // pred_check_branch
          %1655 = sbr.rel (%p1653) target = $region68
        $region67: #{tpu_custom_call.1} parent=63 // pred_region
          %s1656 = sand.u32 %s226, 1
          %s1657 = scalar_lea.sflag [#allocation3], %s1656
          %s1658 = sand.u32 %s226, 1
          %s1659 = smul.addr %s1658, 8
          %s1660 = scalar_lea.vmem [#allocation2], %s1659
          %1661 = dma.done %s1657, 128
        $region68: #{tpu_custom_call.1} parent=63 // pred_fallthru
          _
      $region64: #{tpu_custom_call.1} parent=5 // pred_fallthru
        _
    $region6: #{tpu_custom_call.1} parent=1 // loop_footer
      %s22 = sadd.s32 1, %s18
    $region7: #{tpu_custom_call.1} parent=1 // loop_footer_branch
      %17 = sbr.rel target = $region3
    $region8: #{tpu_custom_call.1} parent=1 // loop_exit
      _
    %1662 = vsyncpa [#allocation3], 1
    %s1663 = scalar_lea.sflag [#allocation3], 1
    %1664 = vsyncpa %s1663, 1

</llo_original>
